<compile_context>
chip_gen: v7x
topology: tpu7x:2x2x1
jax: 0.10.0
libtpu: 0.0.40
codegen_flags: <defaults>
</compile_context>

<pallas_src>
import functools
import math

import jax
import jax.numpy as jnp
from jax import lax
from jax.experimental import pallas as pl
from jax.experimental.pallas import tpu as pltpu

LN_EPS = 1e-5
_INV_SQRT2 = 1.0 / math.sqrt(2.0)


def _round_up(x, m):
    return ((x + m - 1) // m) * m


def _layernorm_residual(x, h, g, b, d_real, d_pad):
    """out = x + LayerNorm(h) * g + b, tolerating zero-padded feature lanes."""
    inv_d = 1.0 / float(d_real)
    mean = jnp.sum(h, axis=-1, keepdims=True) * inv_d
    centered = h - mean
    var = jnp.sum(centered * centered, axis=-1, keepdims=True) * inv_d
    if d_pad != d_real:
        # Padded lanes of h are exactly 0 (zero-padded x / W^T / bias), so they add
        # (d_pad - d_real) * mean^2 to the centered sum-of-squares; remove analytically
        # instead of building a (TM, Dp) mask every grid step.
        var = var - (float(d_pad - d_real) * inv_d) * (mean * mean)
    hn = centered * lax.rsqrt(var + LN_EPS)
    hn = hn * g.astype(jnp.float32) + b.astype(jnp.float32)
    return x.astype(jnp.float32) + hn


def _resident_kernel(x_ref, w_ref, b_ref, g_ref, beta_ref, o_ref,
                     *, d_real, d_pad, mxu_dtype):
    x = x_ref[...]                                              # (TM, Dp)
    xm = x if mxu_dtype is None else x.astype(mxu_dtype)
    # Linear: h = x @ W^T + b  (bf16 operands by default, f32 MXU accumulation).
    h = jnp.dot(xm, w_ref[...], preferred_element_type=jnp.float32)
    h = h + b_ref[...].astype(jnp.float32)
    # Exact (erf) GELU — matches torch.nn.GELU() default.
    h = 0.5 * h * (1.0 + lax.erf(h * _INV_SQRT2))
    o_ref[...] = _layernorm_residual(x, h, g_ref[...], beta_ref[...],
                                     d_real, d_pad).astype(o_ref.dtype)


def _coltiled_kernel(x_ref, w_ref, b_ref, g_ref, beta_ref, o_ref, h_acc,
                     *, d_real, d_pad, tn, mxu_dtype):
    # Grid = (row tiles, W^T column blocks). The GELU'd activation row-block is
    # accumulated column-block by column-block into an f32 VMEM scratch; LN + residual
    # run once all columns are present.
    j = pl.program_id(1)
    x = x_ref[...]                                              # (TM, Dp)
    xm = x if mxu_dtype is None else x.astype(mxu_dtype)
    h = jnp.dot(xm, w_ref[...], preferred_element_type=jnp.float32)   # (TM, TN)
    h = h + b_ref[...].astype(jnp.float32)
    h = 0.5 * h * (1.0 + lax.erf(h * _INV_SQRT2))
    col0 = pl.multiple_of(j * tn, tn)
    h_acc[:, pl.ds(col0, tn)] = h

    @pl.when(j == pl.num_programs(1) - 1)
    def _():
        o_ref[...] = _layernorm_residual(x, h_acc[...], g_ref[...], beta_ref[...],
                                         d_real, d_pad).astype(o_ref.dtype)


def _spec(shape, index_map, single_buffer=False):
    """BlockSpec; constant-index operands request a single VMEM buffer."""
    if single_buffer:
        try:
            return pl.BlockSpec(shape, index_map, pipeline_mode=pl.Buffered(1))
        except (AttributeError, TypeError):
            pass
    return pl.BlockSpec(shape, index_map)


def _vmem_cap():
    try:
        return int(0.85 * pltpu.get_tpu_info().vmem_capacity_bytes)
    except Exception:
        return int(0.85 * (64 << 20))     # conservative: v7x per-TC VMEM


def _pick_tm(Bp, Dp, itemsize, tm):
    if tm is None:
        # Target ~2 MiB per x tile (HBM-roofline sweet spot), capped at 1024 rows.
        tm = max(8, min(1024, ((2 << 20) // max(Dp * itemsize, 1)) // 8 * 8))
    tm = max(8, (tm // 8) * 8)
    if Bp < 2 * tm:
        # Keep >= 2 row-tile grid steps when possible so v7x can shard the
        # "parallel" axis across its two TensorCores.
        tm = _round_up(Bp // 2, 8) if Bp >= 16 else Bp
    return tm


def residual_block(x, weight, bias, gamma, beta, *,
                   mxu_dtype=jnp.bfloat16, tm=None, tn=512, w_resident=None):
    """x: (B, D). weight: (D, D) in PyTorch (out, in) layout. bias/gamma/beta: (D,)."""
    B, D = x.shape
    Dp = _round_up(D, 128)
    Bp = _round_up(B, 8)
    x_isz = x.dtype.itemsize
    TM = _pick_tm(Bp, Dp, x_isz, tm)
    Bp = _round_up(Bp, TM)

    w_t = weight.T                                # (D_in, D_out): kernel computes x @ W^T
    if mxu_dtype is not None and w_t.dtype != mxu_dtype:
        w_t = w_t.astype(mxu_dtype)               # bf16 weights -> native MXU rate
    if Dp != D:
        w_t = jnp.pad(w_t, ((0, Dp - D), (0, Dp - D)))
        bias = jnp.pad(bias, (0, Dp - D))
        gamma = jnp.pad(gamma, (0, Dp - D))
        beta = jnp.pad(beta, (0, Dp - D))
    xp = jnp.pad(x, ((0, Bp - B), (0, Dp - D))) if (Bp, Dp) != (B, D) else x

    b2 = bias.reshape(1, Dp)
    g2 = gamma.reshape(1, Dp)
    be2 = beta.reshape(1, Dp)

    w_isz = w_t.dtype.itemsize
    cap = _vmem_cap()
    headroom = 2 << 20
    need_resident = (Dp * Dp * w_isz              # W^T, single-buffered (resident)
                     + 2 * 2 * TM * Dp * x_isz    # x / out tiles, double-buffered
                     + 3 * Dp * 4                 # bias / gamma / beta
                     + headroom)
    if w_resident is None:
        w_resident = need_resident <= cap

    out_dtype = x.dtype
    grid_rows = Bp // TM

    if w_resident:
        kernel = functools.partial(_resident_kernel, d_real=D, d_pad=Dp,
                                   mxu_dtype=mxu_dtype)

        def build(single_buf):
            return pl.pallas_call(
                kernel,
                out_shape=jax.ShapeDtypeStruct((Bp, Dp), out_dtype),
                grid_spec=pltpu.PrefetchScalarGridSpec(
                    num_scalar_prefetch=0,
                    grid=(grid_rows,),
                    in_specs=[
                        pl.BlockSpec((TM, Dp), lambda i: (i, 0)),        # x (row-tiled)
                        _spec((Dp, Dp), lambda i: (0, 0), single_buf),   # W^T (resident)
                        _spec((1, Dp), lambda i: (0, 0), single_buf),    # bias
                        _spec((1, Dp), lambda i: (0, 0), single_buf),    # ln gamma
                        _spec((1, Dp), lambda i: (0, 0), single_buf),    # ln beta
                    ],
                    out_specs=pl.BlockSpec((TM, Dp), lambda i: (i, 0)),
                ),
                compiler_params=pltpu.CompilerParams(
                    dimension_semantics=("parallel",),
                    vmem_limit_bytes=min(max(int(need_resident), 32 << 20), cap)),
            )(xp, w_t, b2, g2, be2)
    else:
        TN = min(_round_up(tn, 128), Dp)
        while Dp % TN:
            TN -= 128
        grid_cols = Dp // TN
        need_tiled = (2 * Dp * TN * w_isz          # W^T column blocks, double-buffered
                      + 2 * 2 * TM * Dp * x_isz    # x / out tiles, double-buffered
                      + TM * Dp * 4                # f32 accumulator scratch
                      + 2 * 2 * TN * 4 + 2 * Dp * 4
                      + headroom)
        kernel = functools.partial(_coltiled_kernel, d_real=D, d_pad=Dp, tn=TN,
                                   mxu_dtype=mxu_dtype)

        def build(single_buf):
            return pl.pallas_call(
                kernel,
                out_shape=jax.ShapeDtypeStruct((Bp, Dp), out_dtype),
                grid_spec=pltpu.PrefetchScalarGridSpec(
                    num_scalar_prefetch=0,
                    grid=(grid_rows, grid_cols),
                    in_specs=[
                        pl.BlockSpec((TM, Dp), lambda i, j: (i, 0)),      # x (row-tiled)
                        pl.BlockSpec((Dp, TN), lambda i, j: (0, j)),      # W^T column blk
                        pl.BlockSpec((1, TN), lambda i, j: (0, j)),       # bias column blk
                        _spec((1, Dp), lambda i, j: (0, 0), single_buf),  # ln gamma
                        _spec((1, Dp), lambda i, j: (0, 0), single_buf),  # ln beta
                    ],
                    out_specs=pl.BlockSpec((TM, Dp), lambda i, j: (i, 0)),
                    scratch_shapes=[pltpu.VMEM((TM, Dp), jnp.float32)],
                ),
                compiler_params=pltpu.CompilerParams(
                    dimension_semantics=("parallel", "arbitrary"),
                    vmem_limit_bytes=min(max(int(need_tiled), 32 << 20), cap)),
            )(xp, w_t, b2, g2, be2)

    try:
        out = build(True)
    except Exception:
        out = build(False)    # fall back to default double-buffering of constants

    if (Bp, Dp) != (B, D):
        out = out[:B, :D]
    return out


def residual_block_ref(x, weight, bias, gamma, beta):
    """Pure-JAX reference mirroring the PyTorch module (f32, exact GELU)."""
    h = x @ weight.T + bias
    h = 0.5 * h * (1.0 + lax.erf(h * _INV_SQRT2))
    mean = jnp.mean(h, axis=-1, keepdims=True)
    var = jnp.mean((h - mean) ** 2, axis=-1, keepdims=True)
    hn = (h - mean) * lax.rsqrt(var + LN_EPS) * gamma + beta
    return x + hn


def _make_params(key, D, dtype=jnp.float32):
    kw, kb = jax.random.split(key)
    bound = 1.0 / math.sqrt(D)
    weight = jax.random.uniform(kw, (D, D), minval=-bound, maxval=bound, dtype=dtype)
    bias = jax.random.uniform(kb, (D,), minval=-bound, maxval=bound, dtype=dtype)
    gamma = jnp.ones((D,), dtype=dtype)
    beta = jnp.zeros((D,), dtype=dtype)
    return weight, bias, gamma, beta


if __name__ == "__main__":
    key = jax.random.PRNGKey(0)
    k1, k2, k3, k4, k5, k6 = jax.random.split(key, 6)

    # Case 1: default bf16-MXU, resident-weight path, 2 row-tile grid steps.
    B1, D1 = 512, 128
    x1 = jax.random.normal(k1, (B1, D1), dtype=jnp.float32)
    w1, b1, g1, be1 = _make_params(k2, D1)
    out1 = jax.block_until_ready(residual_block(x1, w1, b1, g1, be1))
    ref1 = residual_block_ref(x1, w1, b1, g1, be1)
    assert out1.shape == (B1, D1)
    assert jnp.allclose(out1, ref1, atol=3e-2, rtol=3e-2), (
        f"case1 max abs diff {jnp.max(jnp.abs(out1 - ref1))}")

    # Case 2: small ragged shape (pad + analytic LN correction), exact f32 MXU path.
    B2, D2 = 8, 32
    x2 = jax.random.normal(k3, (B2, D2), dtype=jnp.float32)
    w2, b2, g2, be2 = _make_params(k4, D2)
    out2 = jax.block_until_ready(residual_block(x2, w2, b2, g2, be2, mxu_dtype=None))
    ref2 = residual_block_ref(x2, w2, b2, g2, be2)
    assert out2.shape == (B2, D2)
    assert jnp.allclose(out2, ref2, atol=1e-4, rtol=1e-4), (
        f"case2 max abs diff {jnp.max(jnp.abs(out2 - ref2))}")

    # Case 3: force the column-tiled (non-resident W) fallback, ragged D, f32 path.
    B3, D3 = 64, 160
    x3 = jax.random.normal(k5, (B3, D3), dtype=jnp.float32)
    w3, b3, g3, be3 = _make_params(k6, D3)
    out3 = jax.block_until_ready(
        residual_block(x3, w3, b3, g3, be3, mxu_dtype=None, w_resident=False, tn=128))
    ref3 = residual_block_ref(x3, w3, b3, g3, be3)
    assert out3.shape == (B3, D3)
    assert jnp.allclose(out3, ref3, atol=1e-4, rtol=1e-4), (
        f"case3 max abs diff {jnp.max(jnp.abs(out3 - ref3))}")

    print("KERNEL_OK")
</pallas_src>

<mosaic_0001>
module attributes {stable_mosaic.version = 11 : i64} {
  func.func @_resident_kernel(%arg0: i32, %arg1: memref<256x128xf32, #tpu.memory_space<vmem>>, %arg2: memref<128x128xbf16, #tpu.memory_space<vmem>>, %arg3: memref<1x128xf32, #tpu.memory_space<vmem>>, %arg4: memref<1x128xf32, #tpu.memory_space<vmem>>, %arg5: memref<1x128xf32, #tpu.memory_space<vmem>>, %arg6: memref<256x128xf32, #tpu.memory_space<vmem>>) attributes {dimension_semantics = [#tpu.dimension_semantics<parallel>], iteration_bounds = array<i64: 2>, scalar_prefetch = 0 : i64, scratch_operands = 0 : i64, tpu.core_type = #tpu.core_type<tc>, window_params = [{transform_indices = @transform_0, window_bounds = array<i64: 256, 128>}, {pipeline_mode = #tpu.pipeline_mode<synchronous>, transform_indices = @transform_1, window_bounds = array<i64: 128, 128>}, {pipeline_mode = #tpu.pipeline_mode<synchronous>, transform_indices = @transform_2, window_bounds = array<i64: 1, 128>}, {pipeline_mode = #tpu.pipeline_mode<synchronous>, transform_indices = @transform_3, window_bounds = array<i64: 1, 128>}, {pipeline_mode = #tpu.pipeline_mode<synchronous>, transform_indices = @transform_4, window_bounds = array<i64: 1, 128>}, {transform_indices = @transform_5, window_bounds = array<i64: 256, 128>}]} {
    %c0 = arith.constant 0 : index
    %c0_0 = arith.constant 0 : index
    %0 = vector.load %arg1[%c0, %c0_0] : memref<256x128xf32, #tpu.memory_space<vmem>>, vector<256x128xf32>
    %1 = arith.truncf %0 : vector<256x128xf32> to vector<256x128xbf16>
    %c0_1 = arith.constant 0 : index
    %c0_2 = arith.constant 0 : index
    %2 = vector.load %arg2[%c0_1, %c0_2] : memref<128x128xbf16, #tpu.memory_space<vmem>>, vector<128x128xbf16>
    %cst = arith.constant dense<0.000000e+00> : vector<256x128xf32>
    %3 = tpu.matmul %1, %2, %cst {dimension_numbers = #tpu.dot_dimension_numbers<[1], [0], [0], [1], [0, 0, 1, 1], [], []>} : vector<256x128xbf16>, vector<128x128xbf16>, vector<256x128xf32> -> vector<256x128xf32>
    %c0_3 = arith.constant 0 : index
    %c0_4 = arith.constant 0 : index
    %4 = vector.load %arg3[%c0_3, %c0_4] : memref<1x128xf32, #tpu.memory_space<vmem>>, vector<1x128xf32>
    %5 = vector.broadcast %4 : vector<1x128xf32> to vector<256x128xf32>
    %6 = arith.addf %3, %5 : vector<256x128xf32>
    %cst_5 = arith.constant 5.000000e-01 : f32
    %7 = vector.broadcast %cst_5 : f32 to vector<256x128xf32>
    %8 = arith.mulf %7, %6 : vector<256x128xf32>
    %cst_6 = arith.constant 0.707106769 : f32
    %9 = vector.broadcast %cst_6 : f32 to vector<256x128xf32>
    %10 = arith.mulf %6, %9 : vector<256x128xf32>
    %11 = math.erf %10 : vector<256x128xf32>
    %cst_7 = arith.constant 1.000000e+00 : f32
    %12 = vector.broadcast %cst_7 : f32 to vector<256x128xf32>
    %13 = arith.addf %12, %11 : vector<256x128xf32>
    %14 = arith.mulf %8, %13 : vector<256x128xf32>
    %c0_8 = arith.constant 0 : index
    %c0_9 = arith.constant 0 : index
    %15 = vector.load %arg4[%c0_8, %c0_9] : memref<1x128xf32, #tpu.memory_space<vmem>>, vector<1x128xf32>
    %c0_10 = arith.constant 0 : index
    %c0_11 = arith.constant 0 : index
    %16 = vector.load %arg5[%c0_10, %c0_11] : memref<1x128xf32, #tpu.memory_space<vmem>>, vector<1x128xf32>
    %cst_12 = arith.constant dense<0.000000e+00> : vector<256xf32>
    %17 = vector.multi_reduction <add>, %14, %cst_12 [1] : vector<256x128xf32> to vector<256xf32>
    %18 = vector.shape_cast %17 : vector<256xf32> to vector<256x1xf32>
    %cst_13 = arith.constant 7.812500e-03 : f32
    %19 = vector.broadcast %cst_13 : f32 to vector<256x1xf32>
    %20 = arith.mulf %18, %19 : vector<256x1xf32>
    %21 = vector.broadcast %20 : vector<256x1xf32> to vector<256x128xf32>
    %22 = arith.subf %14, %21 : vector<256x128xf32>
    %23 = arith.mulf %22, %22 : vector<256x128xf32>
    %cst_14 = arith.constant dense<0.000000e+00> : vector<256xf32>
    %24 = vector.multi_reduction <add>, %23, %cst_14 [1] : vector<256x128xf32> to vector<256xf32>
    %25 = vector.shape_cast %24 : vector<256xf32> to vector<256x1xf32>
    %cst_15 = arith.constant 7.812500e-03 : f32
    %26 = vector.broadcast %cst_15 : f32 to vector<256x1xf32>
    %27 = arith.mulf %25, %26 : vector<256x1xf32>
    %cst_16 = arith.constant 9.99999974E-6 : f32
    %28 = vector.broadcast %cst_16 : f32 to vector<256x1xf32>
    %29 = arith.addf %27, %28 : vector<256x1xf32>
    %30 = math.rsqrt %29 : vector<256x1xf32>
    %31 = vector.broadcast %30 : vector<256x1xf32> to vector<256x128xf32>
    %32 = arith.mulf %22, %31 : vector<256x128xf32>
    %33 = vector.broadcast %15 : vector<1x128xf32> to vector<256x128xf32>
    %34 = arith.mulf %32, %33 : vector<256x128xf32>
    %35 = vector.broadcast %16 : vector<1x128xf32> to vector<256x128xf32>
    %36 = arith.addf %34, %35 : vector<256x128xf32>
    %37 = arith.addf %0, %36 : vector<256x128xf32>
    %c0_17 = arith.constant 0 : index
    %c0_18 = arith.constant 0 : index
    %38 = vector.load %arg6[%c0_17, %c0_18] : memref<256x128xf32, #tpu.memory_space<vmem>>, vector<256x128xf32>
    tpu.vector_store %arg6[%c0_17, %c0_18], %37 {strides = array<i32>} : memref<256x128xf32, #tpu.memory_space<vmem>>, vector<256x128xf32>,
    return
  }
  func.func @transform_0(%arg0: i32) -> (i32, i32) {
    %c0_i32 = arith.constant 0 : i32
    %c0_i32_0 = arith.constant 0 : i32
    return %arg0, %c0_i32 : i32, i32
  }
  func.func @transform_1(%arg0: i32) -> (i32, i32) {
    %c0_i32 = arith.constant 0 : i32
    %c0_i32_0 = arith.constant 0 : i32
    %c0_i32_1 = arith.constant 0 : i32
    return %c0_i32, %c0_i32_0 : i32, i32
  }
  func.func @transform_2(%arg0: i32) -> (i32, i32) {
    %c0_i32 = arith.constant 0 : i32
    %c0_i32_0 = arith.constant 0 : i32
    %c0_i32_1 = arith.constant 0 : i32
    return %c0_i32, %c0_i32_0 : i32, i32
  }
  func.func @transform_3(%arg0: i32) -> (i32, i32) {
    %c0_i32 = arith.constant 0 : i32
    %c0_i32_0 = arith.constant 0 : i32
    %c0_i32_1 = arith.constant 0 : i32
    return %c0_i32, %c0_i32_0 : i32, i32
  }
  func.func @transform_4(%arg0: i32) -> (i32, i32) {
    %c0_i32 = arith.constant 0 : i32
    %c0_i32_0 = arith.constant 0 : i32
    %c0_i32_1 = arith.constant 0 : i32
    return %c0_i32, %c0_i32_0 : i32, i32
  }
  func.func @transform_5(%arg0: i32) -> (i32, i32) {
    %c0_i32 = arith.constant 0 : i32
    %c0_i32_0 = arith.constant 0 : i32
    return %arg0, %c0_i32 : i32, i32
  }
}

module attributes {stable_mosaic.version = 11 : i64} {
  func.func @_resident_kernel(%arg0: i32, %arg1: memref<256x128xf32, #tpu.memory_space<vmem>>, %arg2: memref<128x128xbf16, #tpu.memory_space<vmem>>, %arg3: memref<1x128xf32, #tpu.memory_space<vmem>>, %arg4: memref<1x128xf32, #tpu.memory_space<vmem>>, %arg5: memref<1x128xf32, #tpu.memory_space<vmem>>, %arg6: memref<256x128xf32, #tpu.memory_space<vmem>>) attributes {dimension_semantics = [#tpu.dimension_semantics<parallel>], iteration_bounds = array<i64: 2>, scalar_prefetch = 0 : i64, scratch_operands = 0 : i64, tpu.core_type = #tpu.core_type<tc>, window_params = [{transform_indices = @transform_0, window_bounds = array<i64: 256, 128>}, {pipeline_mode = #tpu.pipeline_mode<synchronous>, transform_indices = @transform_1, window_bounds = array<i64: 128, 128>}, {pipeline_mode = #tpu.pipeline_mode<synchronous>, transform_indices = @transform_2, window_bounds = array<i64: 1, 128>}, {pipeline_mode = #tpu.pipeline_mode<synchronous>, transform_indices = @transform_3, window_bounds = array<i64: 1, 128>}, {pipeline_mode = #tpu.pipeline_mode<synchronous>, transform_indices = @transform_4, window_bounds = array<i64: 1, 128>}, {transform_indices = @transform_5, window_bounds = array<i64: 256, 128>}]} {
    %c0 = arith.constant 0 : index
    %c0_0 = arith.constant 0 : index
    %0 = vector.load %arg1[%c0, %c0_0] : memref<256x128xf32, #tpu.memory_space<vmem>>, vector<256x128xf32>
    %1 = arith.truncf %0 : vector<256x128xf32> to vector<256x128xbf16>
    %c0_1 = arith.constant 0 : index
    %c0_2 = arith.constant 0 : index
    %2 = vector.load %arg2[%c0_1, %c0_2] : memref<128x128xbf16, #tpu.memory_space<vmem>>, vector<128x128xbf16>
    %cst = arith.constant dense<0.000000e+00> : vector<256x128xf32>
    %3 = tpu.matmul %1, %2, %cst {dimension_numbers = #tpu.dot_dimension_numbers<[1], [0], [0], [1], [0, 0, 1, 1], [], []>} : vector<256x128xbf16>, vector<128x128xbf16>, vector<256x128xf32> -> vector<256x128xf32>
    %c0_3 = arith.constant 0 : index
    %c0_4 = arith.constant 0 : index
    %4 = vector.load %arg3[%c0_3, %c0_4] : memref<1x128xf32, #tpu.memory_space<vmem>>, vector<1x128xf32>
    %5 = vector.broadcast %4 : vector<1x128xf32> to vector<256x128xf32>
    %6 = arith.addf %3, %5 : vector<256x128xf32>
    %cst_5 = arith.constant 5.000000e-01 : f32
    %7 = vector.broadcast %cst_5 : f32 to vector<256x128xf32>
    %8 = arith.mulf %7, %6 : vector<256x128xf32>
    %cst_6 = arith.constant 0.707106769 : f32
    %9 = vector.broadcast %cst_6 : f32 to vector<256x128xf32>
    %10 = arith.mulf %6, %9 : vector<256x128xf32>
    %11 = math.erf %10 : vector<256x128xf32>
    %cst_7 = arith.constant 1.000000e+00 : f32
    %12 = vector.broadcast %cst_7 : f32 to vector<256x128xf32>
    %13 = arith.addf %12, %11 : vector<256x128xf32>
    %14 = arith.mulf %8, %13 : vector<256x128xf32>
    %c0_8 = arith.constant 0 : index
    %c0_9 = arith.constant 0 : index
    %15 = vector.load %arg4[%c0_8, %c0_9] : memref<1x128xf32, #tpu.memory_space<vmem>>, vector<1x128xf32>
    %c0_10 = arith.constant 0 : index
    %c0_11 = arith.constant 0 : index
    %16 = vector.load %arg5[%c0_10, %c0_11] : memref<1x128xf32, #tpu.memory_space<vmem>>, vector<1x128xf32>
    %cst_12 = arith.constant dense<0.000000e+00> : vector<256xf32>
    %17 = vector.multi_reduction <add>, %14, %cst_12 [1] : vector<256x128xf32> to vector<256xf32>
    %18 = vector.shape_cast %17 : vector<256xf32> to vector<256x1xf32>
    %cst_13 = arith.constant 7.812500e-03 : f32
    %19 = vector.broadcast %cst_13 : f32 to vector<256x1xf32>
    %20 = arith.mulf %18, %19 : vector<256x1xf32>
    %21 = vector.broadcast %20 : vector<256x1xf32> to vector<256x128xf32>
    %22 = arith.subf %14, %21 : vector<256x128xf32>
    %23 = arith.mulf %22, %22 : vector<256x128xf32>
    %cst_14 = arith.constant dense<0.000000e+00> : vector<256xf32>
    %24 = vector.multi_reduction <add>, %23, %cst_14 [1] : vector<256x128xf32> to vector<256xf32>
    %25 = vector.shape_cast %24 : vector<256xf32> to vector<256x1xf32>
    %cst_15 = arith.constant 7.812500e-03 : f32
    %26 = vector.broadcast %cst_15 : f32 to vector<256x1xf32>
    %27 = arith.mulf %25, %26 : vector<256x1xf32>
    %cst_16 = arith.constant 9.99999974E-6 : f32
    %28 = vector.broadcast %cst_16 : f32 to vector<256x1xf32>
    %29 = arith.addf %27, %28 : vector<256x1xf32>
    %30 = math.rsqrt %29 : vector<256x1xf32>
    %31 = vector.broadcast %30 : vector<256x1xf32> to vector<256x128xf32>
    %32 = arith.mulf %22, %31 : vector<256x128xf32>
    %33 = vector.broadcast %15 : vector<1x128xf32> to vector<256x128xf32>
    %34 = arith.mulf %32, %33 : vector<256x128xf32>
    %35 = vector.broadcast %16 : vector<1x128xf32> to vector<256x128xf32>
    %36 = arith.addf %34, %35 : vector<256x128xf32>
    %37 = arith.addf %0, %36 : vector<256x128xf32>
    %c0_17 = arith.constant 0 : index
    %c0_18 = arith.constant 0 : index
    %38 = vector.load %arg6[%c0_17, %c0_18] : memref<256x128xf32, #tpu.memory_space<vmem>>, vector<256x128xf32>
    tpu.vector_store %arg6[%c0_17, %c0_18], %37 {strides = array<i32>} : memref<256x128xf32, #tpu.memory_space<vmem>>, vector<256x128xf32>,
    return
  }
  func.func @transform_0(%arg0: i32) -> (i32, i32) {
    %c0_i32 = arith.constant 0 : i32
    %c0_i32_0 = arith.constant 0 : i32
    return %arg0, %c0_i32 : i32, i32
  }
  func.func @transform_1(%arg0: i32) -> (i32, i32) {
    %c0_i32 = arith.constant 0 : i32
    %c0_i32_0 = arith.constant 0 : i32
    %c0_i32_1 = arith.constant 0 : i32
    return %c0_i32, %c0_i32_0 : i32, i32
  }
  func.func @transform_2(%arg0: i32) -> (i32, i32) {
    %c0_i32 = arith.constant 0 : i32
    %c0_i32_0 = arith.constant 0 : i32
    %c0_i32_1 = arith.constant 0 : i32
    return %c0_i32, %c0_i32_0 : i32, i32
  }
  func.func @transform_3(%arg0: i32) -> (i32, i32) {
    %c0_i32 = arith.constant 0 : i32
    %c0_i32_0 = arith.constant 0 : i32
    %c0_i32_1 = arith.constant 0 : i32
    return %c0_i32, %c0_i32_0 : i32, i32
  }
  func.func @transform_4(%arg0: i32) -> (i32, i32) {
    %c0_i32 = arith.constant 0 : i32
    %c0_i32_0 = arith.constant 0 : i32
    %c0_i32_1 = arith.constant 0 : i32
    return %c0_i32, %c0_i32_0 : i32, i32
  }
  func.func @transform_5(%arg0: i32) -> (i32, i32) {
    %c0_i32 = arith.constant 0 : i32
    %c0_i32_0 = arith.constant 0 : i32
    return %arg0, %c0_i32 : i32, i32
  }
}

</mosaic_0001>

<llo_original>
// kernel: tpu_custom_call.1
$region0: #{tpu_custom_call.1}
  #allocation0 [shape = 'u32[]', space=smem, size = 0x4, offset = 0x4, fixed_abs, tag = 'smem constant byte address 0x4 - core index']
  #allocation1 [shape = 'u32[144,128]{1,0:T(1,128)}', space=vmem, size = 0x12000, scoped, tag = 'internal scratch']
  %s0 = inlined_call_operand.hbm [shape: f32[512,128], index: 0, kind: input, shape index: {}]
  %s1 = inlined_call_operand.hbm [shape: bf16[128,128], index: 1, kind: input, shape index: {}]
  %s2 = inlined_call_operand.vmem [shape: f32[1,128], index: 2, kind: input, shape index: {}]
  %s3 = inlined_call_operand.vmem [shape: f32[1,128], index: 3, kind: input, shape index: {}]
  %s4 = inlined_call_operand.vmem [shape: f32[1,128], index: 4, kind: input, shape index: {}]
  %s5 = inlined_call_operand.hbm [shape: f32[512,128], index: 5, kind: output, shape index: {}]
  %s6 = sld [smem:[#allocation0]]
  $region61: #{tpu_custom_call.1} parent=0
    _
  %s8 = ssub.s32 1, %s6
  %s9 = scalar_select 0, %s8, %s6
  $region1: #{tpu_custom_call.1} parent=0
    #allocation2 [shape = 'u8[262144]{0}', space=vmem, size = 0x40000, scoped, tag = 'input window, operand 0']
    #allocation3 [shape = 's32[2]{0}', space=sflag, size = 0x8, scoped, tag = 'scoped memory for tpu_custom_call.1']
    #allocation4 [shape = 's32[2]{0}', space=sflag, size = 0x8, scoped, tag = 'scoped memory for tpu_custom_call.1']
    #allocation5 [shape = 'u8[32768]{0}', space=vmem, size = 0x8000, scoped, tag = 'input window, operand 1, single buffered']
    #allocation6 [shape = 's32[1]{0}', space=sflag, size = 0x4, scoped, tag = 'scoped memory for tpu_custom_call.1']
    #allocation7 [shape = 'u8[262144]{0}', space=vmem, size = 0x40000, scoped, tag = 'output window, operand 0']
    %10 = vsyncpa [#allocation3], 0
    %s11 = scalar_lea.sflag [#allocation3], 1
    %12 = vsyncpa %s11, 0
    %13 = vsyncpa [#allocation6], 0
    %14 = vsyncpa [#allocation4], 0
    %s15 = scalar_lea.sflag [#allocation4], 1
    %16 = vsyncpa %s15, 0
    loop: start=0, step=1, limit=4
    $region2: #{tpu_custom_call.1} parent=1 // loop_pre_header
      _
    $region3: #{tpu_custom_call.1} parent=1 // loop_header
      %s18 = sphi 0, %s22
      %p19 = scmp.ge.s32.totalorder %s18, 4
      %s28 = sphi 0, %s30
      %s31 = sphi 0, %s28
      %s32 = sphi 0, %s31
      %s48 = sphi 0, %s32
      %s52 = sphi 0, %s52
      %s54 = sphi 0, %s52
      %s55 = sphi 0, %s54
      %s69 = sphi 0, %s55
      %s73 = sphi 0, %s73
      %s75 = sphi 0, %s73
      %s76 = sphi 0, %s75
      %s90 = sphi 0, %s76
      %s94 = sphi 0, %s94
      %s96 = sphi 0, %s94
      %s97 = sphi 0, %s96
      %s111 = sphi 0, %s97
      %s115 = sphi 0, %s115
      %s117 = sphi 0, %s115
      %s118 = sphi 0, %s117
      %s132 = sphi 0, %s118
      %s138 = sphi 0, %s140
      %s141 = sphi 0, %s138
      %s142 = sphi 0, %s141
      %s158 = sphi 0, %s142
    $region4: #{tpu_custom_call.1} parent=1 // loop_header_branch
      %21 = sbr.rel (%p19) target = $region8
    $region5: #{tpu_custom_call.1} parent=1 // loop_body
      %s23 = ssub.s32 %s18, 1
      %s24 = ssub.s32 %s18, 2
      %s25 = sadd.s32 %s18, 1
      %s26 = ssub.s32 %s18, %s25
      %p27 = scmp.eq.s32.totalorder %s26, 0
      %s29 = sadd.s32 %s28, 1
      %s30 = scalar_select %p27, %s28, %s29
      %p33 = pneg %p27
      %p34 = scmp.eq.s32.totalorder %s18, 1
      %p35 = por %p33, %p34
      %p36 = scmp.ne.s32.totalorder %s28, %s31
      %p37 = scmp.eq.s32.totalorder %s18, 0
      %p38 = por %p36, %p37
      %p39 = scmp.ne.s32.totalorder %s28, %s31
      %p40 = scmp.eq.s32.totalorder %s23, 1
      %p41 = por %p39, %p40
      %p42 = scmp.ne.s32.totalorder %s31, %s32
      %p43 = scmp.eq.s32.totalorder %s23, 0
      %p44 = por %p42, %p43
      %p45 = scmp.ne.s32.totalorder %s31, %s32
      %p46 = scmp.eq.s32.totalorder %s24, 1
      %p47 = por %p45, %p46
      %p49 = scmp.ne.s32.totalorder %s32, %s48
      %p50 = scmp.eq.s32.totalorder %s24, 0
      %p51 = por %p49, %p50
      %s53 = sadd.s32 %s52, 1
      %p56 = scmp.eq.s32.totalorder %s18, 1
      %p57 = scmp.ne.s32.totalorder %s52, %s54
      %p58 = scmp.eq.s32.totalorder %s18, 0
      %p59 = por %p57, %p58
      %p60 = scmp.ne.s32.totalorder %s52, %s54
      %p61 = scmp.eq.s32.totalorder %s23, 1
      %p62 = por %p60, %p61
      %p63 = scmp.ne.s32.totalorder %s54, %s55
      %p64 = scmp.eq.s32.totalorder %s23, 0
      %p65 = por %p63, %p64
      %p66 = scmp.ne.s32.totalorder %s54, %s55
      %p67 = scmp.eq.s32.totalorder %s24, 1
      %p68 = por %p66, %p67
      %p70 = scmp.ne.s32.totalorder %s55, %s69
      %p71 = scmp.eq.s32.totalorder %s24, 0
      %p72 = por %p70, %p71
      %s74 = sadd.s32 %s73, 1
      %p77 = scmp.eq.s32.totalorder %s18, 1
      %p78 = scmp.ne.s32.totalorder %s73, %s75
      %p79 = scmp.eq.s32.totalorder %s18, 0
      %p80 = por %p78, %p79
      %p81 = scmp.ne.s32.totalorder %s73, %s75
      %p82 = scmp.eq.s32.totalorder %s23, 1
      %p83 = por %p81, %p82
      %p84 = scmp.ne.s32.totalorder %s75, %s76
      %p85 = scmp.eq.s32.totalorder %s23, 0
      %p86 = por %p84, %p85
      %p87 = scmp.ne.s32.totalorder %s75, %s76
      %p88 = scmp.eq.s32.totalorder %s24, 1
      %p89 = por %p87, %p88
      %p91 = scmp.ne.s32.totalorder %s76, %s90
      %p92 = scmp.eq.s32.totalorder %s24, 0
      %p93 = por %p91, %p92
      %s95 = sadd.s32 %s94, 1
      %p98 = scmp.eq.s32.totalorder %s18, 1
      %p99 = scmp.ne.s32.totalorder %s94, %s96
      %p100 = scmp.eq.s32.totalorder %s18, 0
      %p101 = por %p99, %p100
      %p102 = scmp.ne.s32.totalorder %s94, %s96
      %p103 = scmp.eq.s32.totalorder %s23, 1
      %p104 = por %p102, %p103
      %p105 = scmp.ne.s32.totalorder %s96, %s97
      %p106 = scmp.eq.s32.totalorder %s23, 0
      %p107 = por %p105, %p106
      %p108 = scmp.ne.s32.totalorder %s96, %s97
      %p109 = scmp.eq.s32.totalorder %s24, 1
      %p110 = por %p108, %p109
      %p112 = scmp.ne.s32.totalorder %s97, %s111
      %p113 = scmp.eq.s32.totalorder %s24, 0
      %p114 = por %p112, %p113
      %s116 = sadd.s32 %s115, 1
      %p119 = scmp.eq.s32.totalorder %s18, 1
      %p120 = scmp.ne.s32.totalorder %s115, %s117
      %p121 = scmp.eq.s32.totalorder %s18, 0
      %p122 = por %p120, %p121
      %p123 = scmp.ne.s32.totalorder %s115, %s117
      %p124 = scmp.eq.s32.totalorder %s23, 1
      %p125 = por %p123, %p124
      %p126 = scmp.ne.s32.totalorder %s117, %s118
      %p127 = scmp.eq.s32.totalorder %s23, 0
      %p128 = por %p126, %p127
      %p129 = scmp.ne.s32.totalorder %s117, %s118
      %p130 = scmp.eq.s32.totalorder %s24, 1
      %p131 = por %p129, %p130
      %p133 = scmp.ne.s32.totalorder %s118, %s132
      %p134 = scmp.eq.s32.totalorder %s24, 0
      %p135 = por %p133, %p134
      %s136 = ssub.s32 %s18, %s25
      %p137 = scmp.eq.s32.totalorder %s136, 0
      %s139 = sadd.s32 %s138, 1
      %s140 = scalar_select %p137, %s138, %s139
      %p143 = pneg %p137
      %p144 = scmp.eq.s32.totalorder %s18, 1
      %p145 = por %p143, %p144
      %p146 = scmp.ne.s32.totalorder %s138, %s141
      %p147 = scmp.eq.s32.totalorder %s18, 0
      %p148 = por %p146, %p147
      %p149 = scmp.ne.s32.totalorder %s138, %s141
      %p150 = scmp.eq.s32.totalorder %s23, 1
      %p151 = por %p149, %p150
      %p152 = scmp.ne.s32.totalorder %s141, %s142
      %p153 = scmp.eq.s32.totalorder %s23, 0
      %p154 = por %p152, %p153
      %p155 = scmp.ne.s32.totalorder %s141, %s142
      %p156 = scmp.eq.s32.totalorder %s24, 1
      %p157 = por %p155, %p156
      %p159 = scmp.ne.s32.totalorder %s142, %s158
      %p160 = scmp.eq.s32.totalorder %s24, 0
      %p161 = por %p159, %p160
      %p162 = scmp.le.s32.totalorder 1, %s18
      %p163 = scmp.lt.s32.totalorder %s18, 3
      %p164 = pnand %p162, %p163
      %p165 = pneg %p164
      // Predicated region
      $region9: #{tpu_custom_call.1} parent=5 // pred_check
        _
      $region10: #{tpu_custom_call.1} parent=5 // pred_check_branch
        %167 = sbr.rel (%p164) target = $region12
      $region11: #{tpu_custom_call.1} parent=5 // pred_region
        %s168 = ssub.s32 %s18, 1
        // Predicated region
        $region13: #{tpu_custom_call.1} parent=11 // pred_check
          %p169 = pneg %p65
        $region14: #{tpu_custom_call.1} parent=11 // pred_check_branch
          %171 = sbr.rel (%p169) target = $region16
        $region15: #{tpu_custom_call.1} parent=11 // pred_region
          %s173 = ssub.s32 1024, 1024
          %174 = vsyncadd [#allocation6], %s173
          %s175 = sshll.u32 [#allocation5], 4
          %s176 = int_to_ptr.vmem [resolvable:$true] %s175
          %181 = dma.hbm_to_vmem [thread:$0]  %s1, 1024, %s176, [#allocation6], 64, 64, 4
        $region16: #{tpu_custom_call.1} parent=11 // pred_fallthru
          _
        // Predicated region
        $region17: #{tpu_custom_call.1} parent=11 // pred_check
          %p182 = pneg %p86
        $region18: #{tpu_custom_call.1} parent=11 // pred_check_branch
          %184 = sbr.rel (%p182) target = $region20
        $region19: #{tpu_custom_call.1} parent=11 // pred_region
          _
        $region20: #{tpu_custom_call.1} parent=11 // pred_fallthru
          _
        // Predicated region
        $region21: #{tpu_custom_call.1} parent=11 // pred_check
          %p185 = pneg %p107
        $region22: #{tpu_custom_call.1} parent=11 // pred_check_branch
          %187 = sbr.rel (%p185) target = $region24
        $region23: #{tpu_custom_call.1} parent=11 // pred_region
          _
        $region24: #{tpu_custom_call.1} parent=11 // pred_fallthru
          _
        // Predicated region
        $region25: #{tpu_custom_call.1} parent=11 // pred_check
          %p188 = pneg %p128
        $region26: #{tpu_custom_call.1} parent=11 // pred_check_branch
          %190 = sbr.rel (%p188) target = $region28
        $region27: #{tpu_custom_call.1} parent=11 // pred_region
          _
        $region28: #{tpu_custom_call.1} parent=11 // pred_fallthru
          _
      $region12: #{tpu_custom_call.1} parent=5 // pred_fallthru
        _
      %p191 = scmp.lt.s32.totalorder %s18, 2
      // Predicated region
      $region29: #{tpu_custom_call.1} parent=5 // pred_check
        %p192 = pneg %p191
      $region30: #{tpu_custom_call.1} parent=5 // pred_check_branch
        %194 = sbr.rel (%p192) target = $region32
      $region31: #{tpu_custom_call.1} parent=5 // pred_region
        // Predicated region
        $region33: #{tpu_custom_call.1} parent=31 // pred_check
          %p195 = pneg %p38
        $region34: #{tpu_custom_call.1} parent=31 // pred_check_branch
          %197 = sbr.rel (%p195) target = $region36
        $region35: #{tpu_custom_call.1} parent=31 // pred_region
          %s198 = sand.u32 %s28, 1
          %s199 = scalar_lea.sflag [#allocation3], %s198
          %s200 = sand.u32 %s28, 1
          %s201 = smul.addr %s200, 256
          %s202 = scalar_lea.vmem [#allocation2], %s201
          %s203 = smul.u32 32, %s18
          %s205 = ssub.s32 4096, 4096
          %206 = vsyncadd %s199, %s205
          %s207 = smul.addr %s203, 128
          %s208 = scalar_lea.hbm %s0, %s207
          %s209 = sshll.u32 %s202, 4
          %s210 = int_to_ptr.vmem [resolvable:$true] %s209
          %215 = dma.hbm_to_vmem [thread:$0]  %s208, 4096, %s210, %s199, 128, 128, 8
        $region36: #{tpu_custom_call.1} parent=31 // pred_fallthru
          _
      $region32: #{tpu_custom_call.1} parent=5 // pred_fallthru
        _
      %p216 = scmp.le.s32.totalorder 1, %s18
      %p217 = scmp.lt.s32.totalorder %s18, 3
      %p218 = pnand %p216, %p217
      %p219 = pneg %p218
      // Predicated region
      $region37: #{tpu_custom_call.1} parent=5 // pred_check
        _
      $region38: #{tpu_custom_call.1} parent=5 // pred_check_branch
        %221 = sbr.rel (%p218) target = $region40
      $region39: #{tpu_custom_call.1} parent=5 // pred_region
        %s222 = ssub.s32 %s18, 1
        %s223 = sand.u32 %s31, 1
        %s224 = scalar_lea.sflag [#allocation3], %s223
        %s225 = sand.u32 %s31, 1
        %s226 = smul.addr %s225, 256
        %s227 = scalar_lea.vmem [#allocation2], %s226
        // Predicated region
        $region41: #{tpu_custom_call.1} parent=39 // pred_check
          %p228 = pneg %p44
        $region42: #{tpu_custom_call.1} parent=39 // pred_check_branch
          %230 = sbr.rel (%p228) target = $region44
        $region43: #{tpu_custom_call.1} parent=39 // pred_region
          %231 = dma.done %s224, 4096
        $region44: #{tpu_custom_call.1} parent=39 // pred_fallthru
          _
        // Predicated region
        $region45: #{tpu_custom_call.1} parent=39 // pred_check
          %p232 = pneg %p65
        $region46: #{tpu_custom_call.1} parent=39 // pred_check_branch
          %234 = sbr.rel (%p232) target = $region48
        $region47: #{tpu_custom_call.1} parent=39 // pred_region
          %235 = dma.done [#allocation6], 1024
        $region48: #{tpu_custom_call.1} parent=39 // pred_fallthru
          _
        %s236 = sand.u32 %s31, 1
        %s237 = scalar_lea.sflag [#allocation3], %s236
        %s238 = sand.u32 %s31, 1
        %s239 = smul.addr %s238, 256
        %s240 = scalar_lea.vmem [#allocation2], %s239
        %p241 = pneg %p44
        %p242 = pneg %p41
        %p243 = pneg %p65
        %p244 = pneg %p62
        %p245 = pneg %p86
        %p246 = pneg %p83
        %p247 = pneg %p107
        %p248 = pneg %p104
        %p249 = pneg %p128
        %p250 = pneg %p125
        %p251 = pneg %p154
        %p252 = pneg %p151
        %s253 = sand.u32 %s141, 1
        %s254 = scalar_lea.sflag [#allocation4], %s253
        %s255 = sand.u32 %s141, 1
        %s256 = smul.addr %s255, 256
        %s257 = scalar_lea.vmem [#allocation7], %s256
        %s258 = smul.u32 32, %s23
        %s259 = smul.u32 32, %s23
        %v261 = vld [vmem:[%s227] sm:$0xff]
        %v262 = vld [vmem:[%s227 + $0x8] sm:$0xff]
        %v263 = vld [vmem:[%s227 + $0x10] sm:$0xff]
        %v264 = vld [vmem:[%s227 + $0x18] sm:$0xff]
        %v265 = vld [vmem:[%s227 + $0x20] sm:$0xff]
        %v266 = vld [vmem:[%s227 + $0x28] sm:$0xff]
        %v267 = vld [vmem:[%s227 + $0x30] sm:$0xff]
        %v268 = vld [vmem:[%s227 + $0x38] sm:$0xff]
        %v269 = vld [vmem:[%s227 + $0x40] sm:$0xff]
        %v270 = vld [vmem:[%s227 + $0x48] sm:$0xff]
        %v271 = vld [vmem:[%s227 + $0x50] sm:$0xff]
        %v272 = vld [vmem:[%s227 + $0x58] sm:$0xff]
        %v273 = vld [vmem:[%s227 + $0x60] sm:$0xff]
        %v274 = vld [vmem:[%s227 + $0x68] sm:$0xff]
        %v275 = vld [vmem:[%s227 + $0x70] sm:$0xff]
        %v276 = vld [vmem:[%s227 + $0x78] sm:$0xff]
        %v277 = vld [vmem:[%s227 + $0x80] sm:$0xff]
        %v278 = vld [vmem:[%s227 + $0x88] sm:$0xff]
        %v279 = vld [vmem:[%s227 + $0x90] sm:$0xff]
        %v280 = vld [vmem:[%s227 + $0x98] sm:$0xff]
        %v281 = vld [vmem:[%s227 + $0xa0] sm:$0xff]
        %v282 = vld [vmem:[%s227 + $0xa8] sm:$0xff]
        %v283 = vld [vmem:[%s227 + $0xb0] sm:$0xff]
        %v284 = vld [vmem:[%s227 + $0xb8] sm:$0xff]
        %v285 = vld [vmem:[%s227 + $0xc0] sm:$0xff]
        %v286 = vld [vmem:[%s227 + $0xc8] sm:$0xff]
        %v287 = vld [vmem:[%s227 + $0xd0] sm:$0xff]
        %v288 = vld [vmem:[%s227 + $0xd8] sm:$0xff]
        %v289 = vld [vmem:[%s227 + $0xe0] sm:$0xff]
        %v290 = vld [vmem:[%s227 + $0xe8] sm:$0xff]
        %v291 = vld [vmem:[%s227 + $0xf0] sm:$0xff]
        %v292 = vld [vmem:[%s227 + $0xf8] sm:$0xff]
        %v293 = vpack.c.bf16 %v262, %v261
        %v294 = vpack.c.bf16 %v264, %v263
        %v295 = vpack.c.bf16 %v266, %v265
        %v296 = vpack.c.bf16 %v268, %v267
        %v297 = vpack.c.bf16 %v270, %v269
        %v298 = vpack.c.bf16 %v272, %v271
        %v299 = vpack.c.bf16 %v274, %v273
        %v300 = vpack.c.bf16 %v276, %v275
        %v301 = vpack.c.bf16 %v278, %v277
        %v302 = vpack.c.bf16 %v280, %v279
        %v303 = vpack.c.bf16 %v282, %v281
        %v304 = vpack.c.bf16 %v284, %v283
        %v305 = vpack.c.bf16 %v286, %v285
        %v306 = vpack.c.bf16 %v288, %v287
        %v307 = vpack.c.bf16 %v290, %v289
        %v308 = vpack.c.bf16 %v292, %v291
        %v309 = vld [vmem:[#allocation5] sm:$0xf]
        %v310 = vld [vmem:[#allocation5 + $0x4] sm:$0xf]
        %v311 = vld [vmem:[#allocation5 + $0x8] sm:$0xf]
        %v312 = vld [vmem:[#allocation5 + $0xc] sm:$0xf]
        %v313 = vld [vmem:[#allocation5 + $0x10] sm:$0xf]
        %v314 = vld [vmem:[#allocation5 + $0x14] sm:$0xf]
        %v315 = vld [vmem:[#allocation5 + $0x18] sm:$0xf]
        %v316 = vld [vmem:[#allocation5 + $0x1c] sm:$0xf]
        %v317 = vld [vmem:[#allocation5 + $0x20] sm:$0xf]
        %v318 = vld [vmem:[#allocation5 + $0x24] sm:$0xf]
        %v319 = vld [vmem:[#allocation5 + $0x28] sm:$0xf]
        %v320 = vld [vmem:[#allocation5 + $0x2c] sm:$0xf]
        %v321 = vld [vmem:[#allocation5 + $0x30] sm:$0xf]
        %v322 = vld [vmem:[#allocation5 + $0x34] sm:$0xf]
        %v323 = vld [vmem:[#allocation5 + $0x38] sm:$0xf]
        %v324 = vld [vmem:[#allocation5 + $0x3c] sm:$0xf]
        %v325 = vld [vmem:[%s2] sm:$0x1]
        %v327 = vlaneseq
        %v328 = vshrl.u32 %v327, 7
        %v329 = vsub.s32 0, %v328
        %v330 = vrot.slane %v325, %v329
        %v348 = vunpack.c.l.b16 %v309
        %v349 = vunpack.c.l.b16 %v310
        %v350 = vunpack.c.l.b16 %v311
        %v351 = vunpack.c.l.b16 %v312
        %v352 = vunpack.c.l.b16 %v313
        %v353 = vunpack.c.l.b16 %v314
        %v354 = vunpack.c.l.b16 %v315
        %v355 = vunpack.c.l.b16 %v316
        %v356 = vunpack.c.l.b16 %v317
        %v357 = vunpack.c.l.b16 %v318
        %v358 = vunpack.c.l.b16 %v319
        %v359 = vunpack.c.l.b16 %v320
        %v360 = vunpack.c.l.b16 %v321
        %v361 = vunpack.c.l.b16 %v322
        %v362 = vunpack.c.l.b16 %v323
        %v363 = vunpack.c.l.b16 %v324
        %v364 = vpack.c.b16 %v349, %v348
        %v365 = vpack.c.b16 %v351, %v350
        %v366 = vpack.c.b16 %v353, %v352
        %v367 = vpack.c.b16 %v355, %v354
        %v368 = vpack.c.b16 %v357, %v356
        %v369 = vpack.c.b16 %v359, %v358
        %v370 = vpack.c.b16 %v361, %v360
        %v371 = vpack.c.b16 %v363, %v362
        %380 = vmatprep.subr.bf16.mxu0 0
        %381 = vmatpush1.bf16.msra.mxu0 %v364
        %382 = vmatprep.subr.bf16.mxu0 0
        %383 = vmatpush1.bf16.msra.mxu0 %v365
        %384 = vmatprep.subr.bf16.mxu0 0
        %385 = vmatpush1.bf16.msra.mxu0 %v366
        %386 = vmatprep.subr.bf16.mxu0 0
        %387 = vmatpush1.bf16.msra.mxu0 %v367
        %388 = vmatprep.subr.bf16.mxu0 0
        %389 = vmatpush1.bf16.msra.mxu0 %v368
        %390 = vmatprep.subr.bf16.mxu0 0
        %391 = vmatpush1.bf16.msra.mxu0 %v369
        %392 = vmatprep.subr.bf16.mxu0 0
        %393 = vmatpush1.bf16.msra.mxu0 %v370
        %394 = vmatprep.subr.bf16.mxu0 0
        %395 = vmatpush1.bf16.msra.mxu0 %v371
        %396 = vmatprep.subr.bf16.mxu0 0
        %397 = vmatpush1.bf16.msra.mxu0 0
        %398 = vmatprep.subr.bf16.mxu0 0
        %399 = vmatpush1.bf16.msra.mxu0 0
        %400 = vmatprep.subr.bf16.mxu0 0
        %401 = vmatpush1.bf16.msra.mxu0 0
        %402 = vmatprep.subr.bf16.mxu0 0
        %403 = vmatpush1.bf16.msra.mxu0 0
        %404 = vmatprep.subr.bf16.mxu0 0
        %405 = vmatpush1.bf16.msra.mxu0 0
        %406 = vmatprep.subr.bf16.mxu0 0
        %407 = vmatpush1.bf16.msra.mxu0 0
        %408 = vmatprep.subr.bf16.mxu0 0
        %409 = vmatpush1.bf16.msra.mxu0 0
        %410 = vmatprep.subr.bf16.mxu0 0
        %411 = vmatpush1.bf16.msra.mxu0 0
        %412 = vmatprep.mubr.bf16.mxu0 0
        %413 = vmatmul.mubr.bf16.gmra.mrb[0].mxu0 %v293
        %v414 = vpop.f32.mrb[0].mxu0
        %v415 = vadd.f32 %v330, %v414
        %v416 = vpop.f32.mrb[0].mxu0
        %v417 = vpop.f32.mrb[0].mxu0
        %v418 = vadd.f32 %v330, %v417
        %v419 = vpop.f32.mrb[0].mxu0
        %420 = vmatprep.mubr.bf16.mxu0 0
        %421 = vmatmul.mubr.bf16.gmra.mrb[0].mxu0 %v294
        %v422 = vpop.f32.mrb[0].mxu0
        %v423 = vadd.f32 %v330, %v422
        %v424 = vpop.f32.mrb[0].mxu0
        %v425 = vpop.f32.mrb[0].mxu0
        %v426 = vadd.f32 %v330, %v425
        %v427 = vpop.f32.mrb[0].mxu0
        %428 = vmatprep.mubr.bf16.mxu0 0
        %429 = vmatmul.mubr.bf16.gmra.mrb[0].mxu0 %v295
        %v430 = vpop.f32.mrb[0].mxu0
        %v431 = vadd.f32 %v330, %v430
        %v432 = vpop.f32.mrb[0].mxu0
        %v433 = vpop.f32.mrb[0].mxu0
        %v434 = vadd.f32 %v330, %v433
        %v435 = vpop.f32.mrb[0].mxu0
        %436 = vmatprep.mubr.bf16.mxu0 0
        %437 = vmatmul.mubr.bf16.gmra.mrb[0].mxu0 %v296
        %v438 = vpop.f32.mrb[0].mxu0
        %v439 = vadd.f32 %v330, %v438
        %v440 = vpop.f32.mrb[0].mxu0
        %v441 = vpop.f32.mrb[0].mxu0
        %v442 = vadd.f32 %v330, %v441
        %v443 = vpop.f32.mrb[0].mxu0
        %444 = vmatprep.mubr.bf16.mxu0 0
        %445 = vmatmul.mubr.bf16.gmra.mrb[0].mxu0 %v297
        %v446 = vpop.f32.mrb[0].mxu0
        %v447 = vadd.f32 %v330, %v446
        %v448 = vpop.f32.mrb[0].mxu0
        %v449 = vpop.f32.mrb[0].mxu0
        %v450 = vadd.f32 %v330, %v449
        %v451 = vpop.f32.mrb[0].mxu0
        %452 = vmatprep.mubr.bf16.mxu0 0
        %453 = vmatmul.mubr.bf16.gmra.mrb[0].mxu0 %v298
        %v454 = vpop.f32.mrb[0].mxu0
        %v455 = vadd.f32 %v330, %v454
        %v456 = vpop.f32.mrb[0].mxu0
        %v457 = vpop.f32.mrb[0].mxu0
        %v458 = vadd.f32 %v330, %v457
        %v459 = vpop.f32.mrb[0].mxu0
        %460 = vmatprep.mubr.bf16.mxu0 0
        %461 = vmatmul.mubr.bf16.gmra.mrb[0].mxu0 %v299
        %v462 = vpop.f32.mrb[0].mxu0
        %v463 = vadd.f32 %v330, %v462
        %v464 = vpop.f32.mrb[0].mxu0
        %v465 = vpop.f32.mrb[0].mxu0
        %v466 = vadd.f32 %v330, %v465
        %v467 = vpop.f32.mrb[0].mxu0
        %468 = vmatprep.mubr.bf16.mxu0 0
        %469 = vmatmul.mubr.bf16.gmra.mrb[0].mxu0 %v300
        %v470 = vpop.f32.mrb[0].mxu0
        %v471 = vadd.f32 %v330, %v470
        %v472 = vpop.f32.mrb[0].mxu0
        %v473 = vpop.f32.mrb[0].mxu0
        %v474 = vadd.f32 %v330, %v473
        %v475 = vpop.f32.mrb[0].mxu0
        %476 = vmatprep.mubr.bf16.mxu0 0
        %477 = vmatmul.mubr.bf16.gmra.mrb[0].mxu0 %v301
        %v478 = vpop.f32.mrb[0].mxu0
        %v479 = vadd.f32 %v330, %v478
        %v480 = vpop.f32.mrb[0].mxu0
        %v481 = vpop.f32.mrb[0].mxu0
        %v482 = vadd.f32 %v330, %v481
        %v483 = vpop.f32.mrb[0].mxu0
        %484 = vmatprep.mubr.bf16.mxu0 0
        %485 = vmatmul.mubr.bf16.gmra.mrb[0].mxu0 %v302
        %v486 = vpop.f32.mrb[0].mxu0
        %v487 = vadd.f32 %v330, %v486
        %v488 = vpop.f32.mrb[0].mxu0
        %v489 = vpop.f32.mrb[0].mxu0
        %v490 = vadd.f32 %v330, %v489
        %v491 = vpop.f32.mrb[0].mxu0
        %492 = vmatprep.mubr.bf16.mxu0 0
        %493 = vmatmul.mubr.bf16.gmra.mrb[0].mxu0 %v303
        %v494 = vpop.f32.mrb[0].mxu0
        %v495 = vadd.f32 %v330, %v494
        %v496 = vpop.f32.mrb[0].mxu0
        %v497 = vpop.f32.mrb[0].mxu0
        %v498 = vadd.f32 %v330, %v497
        %v499 = vpop.f32.mrb[0].mxu0
        %500 = vmatprep.mubr.bf16.mxu0 0
        %501 = vmatmul.mubr.bf16.gmra.mrb[0].mxu0 %v304
        %v502 = vpop.f32.mrb[0].mxu0
        %v503 = vadd.f32 %v330, %v502
        %v504 = vpop.f32.mrb[0].mxu0
        %v505 = vpop.f32.mrb[0].mxu0
        %v506 = vadd.f32 %v330, %v505
        %v507 = vpop.f32.mrb[0].mxu0
        %508 = vmatprep.mubr.bf16.mxu0 0
        %509 = vmatmul.mubr.bf16.gmra.mrb[0].mxu0 %v305
        %v510 = vpop.f32.mrb[0].mxu0
        %v511 = vadd.f32 %v330, %v510
        %v512 = vpop.f32.mrb[0].mxu0
        %v513 = vpop.f32.mrb[0].mxu0
        %v514 = vadd.f32 %v330, %v513
        %v515 = vpop.f32.mrb[0].mxu0
        %516 = vmatprep.mubr.bf16.mxu0 0
        %517 = vmatmul.mubr.bf16.gmra.mrb[0].mxu0 %v306
        %v518 = vpop.f32.mrb[0].mxu0
        %v519 = vadd.f32 %v330, %v518
        %v520 = vpop.f32.mrb[0].mxu0
        %v521 = vpop.f32.mrb[0].mxu0
        %v522 = vadd.f32 %v330, %v521
        %v523 = vpop.f32.mrb[0].mxu0
        %524 = vmatprep.mubr.bf16.mxu0 0
        %525 = vmatmul.mubr.bf16.gmra.mrb[0].mxu0 %v307
        %v526 = vpop.f32.mrb[0].mxu0
        %v527 = vadd.f32 %v330, %v526
        %v528 = vpop.f32.mrb[0].mxu0
        %v529 = vpop.f32.mrb[0].mxu0
        %v530 = vadd.f32 %v330, %v529
        %v531 = vpop.f32.mrb[0].mxu0
        %532 = vmatprep.mubr.bf16.mxu0 0
        %533 = vmatmul.mubr.bf16.gmra.mrb[0].mxu0 %v308
        %v534 = vpop.f32.mrb[0].mxu0
        %v535 = vadd.f32 %v330, %v534
        %v536 = vpop.f32.mrb[0].mxu0
        %v537 = vpop.f32.mrb[0].mxu0
        %v538 = vadd.f32 %v330, %v537
        %v539 = vpop.f32.mrb[0].mxu0
        %540 = vdwg.mxu0
        %v541 = vmul.f32 %v415, 0.5
        %v542 = vmul.f32 %v418, 0.5
        %v543 = vmul.f32 %v423, 0.5
        %v544 = vmul.f32 %v426, 0.5
        %v545 = vmul.f32 %v431, 0.5
        %v546 = vmul.f32 %v434, 0.5
        %v547 = vmul.f32 %v439, 0.5
        %v548 = vmul.f32 %v442, 0.5
        %v549 = vmul.f32 %v447, 0.5
        %v550 = vmul.f32 %v450, 0.5
        %v551 = vmul.f32 %v455, 0.5
        %v552 = vmul.f32 %v458, 0.5
        %v553 = vmul.f32 %v463, 0.5
        %v554 = vmul.f32 %v466, 0.5
        %v555 = vmul.f32 %v471, 0.5
        %v556 = vmul.f32 %v474, 0.5
        %v557 = vmul.f32 %v479, 0.5
        %v558 = vmul.f32 %v482, 0.5
        %v559 = vmul.f32 %v487, 0.5
        %v560 = vmul.f32 %v490, 0.5
        %v561 = vmul.f32 %v495, 0.5
        %v562 = vmul.f32 %v498, 0.5
        %v563 = vmul.f32 %v503, 0.5
        %v564 = vmul.f32 %v506, 0.5
        %v565 = vmul.f32 %v511, 0.5
        %v566 = vmul.f32 %v514, 0.5
        %v567 = vmul.f32 %v519, 0.5
        %v568 = vmul.f32 %v522, 0.5
        %v569 = vmul.f32 %v527, 0.5
        %v570 = vmul.f32 %v530, 0.5
        %v571 = vmul.f32 %v535, 0.5
        %v572 = vmul.f32 %v538, 0.5
        %v573 = vmul.f32 %v415, 0.70710677
        %v574 = vmul.f32 %v418, 0.70710677
        %v575 = vmul.f32 %v423, 0.70710677
        %v576 = vmul.f32 %v426, 0.70710677
        %v577 = vmul.f32 %v431, 0.70710677
        %v578 = vmul.f32 %v434, 0.70710677
        %v579 = vmul.f32 %v439, 0.70710677
        %v580 = vmul.f32 %v442, 0.70710677
        %v581 = vmul.f32 %v447, 0.70710677
        %v582 = vmul.f32 %v450, 0.70710677
        %v583 = vmul.f32 %v455, 0.70710677
        %v584 = vmul.f32 %v458, 0.70710677
        %v585 = vmul.f32 %v463, 0.70710677
        %v586 = vmul.f32 %v466, 0.70710677
        %v587 = vmul.f32 %v471, 0.70710677
        %v588 = vmul.f32 %v474, 0.70710677
        %v589 = vmul.f32 %v479, 0.70710677
        %v590 = vmul.f32 %v482, 0.70710677
        %v591 = vmul.f32 %v487, 0.70710677
        %v592 = vmul.f32 %v490, 0.70710677
        %v593 = vmul.f32 %v495, 0.70710677
        %v594 = vmul.f32 %v498, 0.70710677
        %v595 = vmul.f32 %v503, 0.70710677
        %v596 = vmul.f32 %v506, 0.70710677
        %v597 = vmul.f32 %v511, 0.70710677
        %v598 = vmul.f32 %v514, 0.70710677
        %v599 = vmul.f32 %v519, 0.70710677
        %v600 = vmul.f32 %v522, 0.70710677
        %v601 = vmul.f32 %v527, 0.70710677
        %v602 = vmul.f32 %v530, 0.70710677
        %v603 = vmul.f32 %v535, 0.70710677
        %v604 = vmul.f32 %v538, 0.70710677
        %v605 = verf.f32.pop %v573
        %v606 = verf.f32.pop %v574
        %v607 = verf.f32.pop %v575
        %v608 = verf.f32.pop %v576
        %v609 = verf.f32.pop %v577
        %v610 = verf.f32.pop %v578
        %v611 = verf.f32.pop %v579
        %v612 = verf.f32.pop %v580
        %v613 = verf.f32.pop %v581
        %v614 = verf.f32.pop %v582
        %v615 = verf.f32.pop %v583
        %v616 = verf.f32.pop %v584
        %v617 = verf.f32.pop %v585
        %v618 = verf.f32.pop %v586
        %v619 = verf.f32.pop %v587
        %v620 = verf.f32.pop %v588
        %v621 = verf.f32.pop %v589
        %v622 = verf.f32.pop %v590
        %v623 = verf.f32.pop %v591
        %v624 = verf.f32.pop %v592
        %v625 = verf.f32.pop %v593
        %v626 = verf.f32.pop %v594
        %v627 = verf.f32.pop %v595
        %v628 = verf.f32.pop %v596
        %v629 = verf.f32.pop %v597
        %v630 = verf.f32.pop %v598
        %v631 = verf.f32.pop %v599
        %v632 = verf.f32.pop %v600
        %v633 = verf.f32.pop %v601
        %v634 = verf.f32.pop %v602
        %v635 = verf.f32.pop %v603
        %v636 = verf.f32.pop %v604
        %v637 = vadd.f32 %v605, 1.0
        %v638 = vadd.f32 %v606, 1.0
        %v639 = vadd.f32 %v607, 1.0
        %v640 = vadd.f32 %v608, 1.0
        %v641 = vadd.f32 %v609, 1.0
        %v642 = vadd.f32 %v610, 1.0
        %v643 = vadd.f32 %v611, 1.0
        %v644 = vadd.f32 %v612, 1.0
        %v645 = vadd.f32 %v613, 1.0
        %v646 = vadd.f32 %v614, 1.0
        %v647 = vadd.f32 %v615, 1.0
        %v648 = vadd.f32 %v616, 1.0
        %v649 = vadd.f32 %v617, 1.0
        %v650 = vadd.f32 %v618, 1.0
        %v651 = vadd.f32 %v619, 1.0
        %v652 = vadd.f32 %v620, 1.0
        %v653 = vadd.f32 %v621, 1.0
        %v654 = vadd.f32 %v622, 1.0
        %v655 = vadd.f32 %v623, 1.0
        %v656 = vadd.f32 %v624, 1.0
        %v657 = vadd.f32 %v625, 1.0
        %v658 = vadd.f32 %v626, 1.0
        %v659 = vadd.f32 %v627, 1.0
        %v660 = vadd.f32 %v628, 1.0
        %v661 = vadd.f32 %v629, 1.0
        %v662 = vadd.f32 %v630, 1.0
        %v663 = vadd.f32 %v631, 1.0
        %v664 = vadd.f32 %v632, 1.0
        %v665 = vadd.f32 %v633, 1.0
        %v666 = vadd.f32 %v634, 1.0
        %v667 = vadd.f32 %v635, 1.0
        %v668 = vadd.f32 %v636, 1.0
        %v669 = vmul.f32 %v541, %v637
        %v670 = vmul.f32 %v542, %v638
        %v671 = vmul.f32 %v543, %v639
        %v672 = vmul.f32 %v544, %v640
        %v673 = vmul.f32 %v545, %v641
        %v674 = vmul.f32 %v546, %v642
        %v675 = vmul.f32 %v547, %v643
        %v676 = vmul.f32 %v548, %v644
        %v677 = vmul.f32 %v549, %v645
        %v678 = vmul.f32 %v550, %v646
        %v679 = vmul.f32 %v551, %v647
        %v680 = vmul.f32 %v552, %v648
        %v681 = vmul.f32 %v553, %v649
        %v682 = vmul.f32 %v554, %v650
        %v683 = vmul.f32 %v555, %v651
        %v684 = vmul.f32 %v556, %v652
        %v685 = vmul.f32 %v557, %v653
        %v686 = vmul.f32 %v558, %v654
        %v687 = vmul.f32 %v559, %v655
        %v688 = vmul.f32 %v560, %v656
        %v689 = vmul.f32 %v561, %v657
        %v690 = vmul.f32 %v562, %v658
        %v691 = vmul.f32 %v563, %v659
        %v692 = vmul.f32 %v564, %v660
        %v693 = vmul.f32 %v565, %v661
        %v694 = vmul.f32 %v566, %v662
        %v695 = vmul.f32 %v567, %v663
        %v696 = vmul.f32 %v568, %v664
        %v697 = vmul.f32 %v569, %v665
        %v698 = vmul.f32 %v570, %v666
        %v699 = vmul.f32 %v571, %v667
        %v700 = vmul.f32 %v572, %v668
        %v701 = vld [vmem:[%s3] sm:$0x1]
        %v702 = vld [vmem:[%s4] sm:$0x1]
        %703 = vadd.xlane.f32.xlu0 %v669
        %v704 = vpop.xlane.xlu0 %703
        %705 = vadd.xlane.f32.xlu0 %v670
        %v706 = vpop.xlane.xlu0 %705
        %707 = vadd.xlane.f32.xlu0 %v671
        %v708 = vpop.xlane.xlu0 %707
        %709 = vadd.xlane.f32.xlu0 %v672
        %v710 = vpop.xlane.xlu0 %709
        %711 = vadd.xlane.f32.xlu0 %v673
        %v712 = vpop.xlane.xlu0 %711
        %713 = vadd.xlane.f32.xlu0 %v674
        %v714 = vpop.xlane.xlu0 %713
        %715 = vadd.xlane.f32.xlu0 %v675
        %v716 = vpop.xlane.xlu0 %715
        %717 = vadd.xlane.f32.xlu0 %v676
        %v718 = vpop.xlane.xlu0 %717
        %719 = vadd.xlane.f32.xlu0 %v677
        %v720 = vpop.xlane.xlu0 %719
        %721 = vadd.xlane.f32.xlu0 %v678
        %v722 = vpop.xlane.xlu0 %721
        %723 = vadd.xlane.f32.xlu0 %v679
        %v724 = vpop.xlane.xlu0 %723
        %725 = vadd.xlane.f32.xlu0 %v680
        %v726 = vpop.xlane.xlu0 %725
        %727 = vadd.xlane.f32.xlu0 %v681
        %v728 = vpop.xlane.xlu0 %727
        %729 = vadd.xlane.f32.xlu0 %v682
        %v730 = vpop.xlane.xlu0 %729
        %731 = vadd.xlane.f32.xlu0 %v683
        %v732 = vpop.xlane.xlu0 %731
        %733 = vadd.xlane.f32.xlu0 %v684
        %v734 = vpop.xlane.xlu0 %733
        %735 = vadd.xlane.f32.xlu0 %v685
        %v736 = vpop.xlane.xlu0 %735
        %737 = vadd.xlane.f32.xlu0 %v686
        %v738 = vpop.xlane.xlu0 %737
        %739 = vadd.xlane.f32.xlu0 %v687
        %v740 = vpop.xlane.xlu0 %739
        %741 = vadd.xlane.f32.xlu0 %v688
        %v742 = vpop.xlane.xlu0 %741
        %743 = vadd.xlane.f32.xlu0 %v689
        %v744 = vpop.xlane.xlu0 %743
        %745 = vadd.xlane.f32.xlu0 %v690
        %v746 = vpop.xlane.xlu0 %745
        %747 = vadd.xlane.f32.xlu0 %v691
        %v748 = vpop.xlane.xlu0 %747
        %749 = vadd.xlane.f32.xlu0 %v692
        %v750 = vpop.xlane.xlu0 %749
        %751 = vadd.xlane.f32.xlu0 %v693
        %v752 = vpop.xlane.xlu0 %751
        %753 = vadd.xlane.f32.xlu0 %v694
        %v754 = vpop.xlane.xlu0 %753
        %755 = vadd.xlane.f32.xlu0 %v695
        %v756 = vpop.xlane.xlu0 %755
        %757 = vadd.xlane.f32.xlu0 %v696
        %v758 = vpop.xlane.xlu0 %757
        %759 = vadd.xlane.f32.xlu0 %v697
        %v760 = vpop.xlane.xlu0 %759
        %761 = vadd.xlane.f32.xlu0 %v698
        %v762 = vpop.xlane.xlu0 %761
        %763 = vadd.xlane.f32.xlu0 %v699
        %v764 = vpop.xlane.xlu0 %763
        %765 = vadd.xlane.f32.xlu0 %v700
        %v766 = vpop.xlane.xlu0 %765
        %v767 = vmul.f32 %v704, 0.0078125
        %v768 = vmul.f32 %v706, 0.0078125
        %v769 = vmul.f32 %v708, 0.0078125
        %v770 = vmul.f32 %v710, 0.0078125
        %v771 = vmul.f32 %v712, 0.0078125
        %v772 = vmul.f32 %v714, 0.0078125
        %v773 = vmul.f32 %v716, 0.0078125
        %v774 = vmul.f32 %v718, 0.0078125
        %v775 = vmul.f32 %v720, 0.0078125
        %v776 = vmul.f32 %v722, 0.0078125
        %v777 = vmul.f32 %v724, 0.0078125
        %v778 = vmul.f32 %v726, 0.0078125
        %v779 = vmul.f32 %v728, 0.0078125
        %v780 = vmul.f32 %v730, 0.0078125
        %v781 = vmul.f32 %v732, 0.0078125
        %v782 = vmul.f32 %v734, 0.0078125
        %v783 = vmul.f32 %v736, 0.0078125
        %v784 = vmul.f32 %v738, 0.0078125
        %v785 = vmul.f32 %v740, 0.0078125
        %v786 = vmul.f32 %v742, 0.0078125
        %v787 = vmul.f32 %v744, 0.0078125
        %v788 = vmul.f32 %v746, 0.0078125
        %v789 = vmul.f32 %v748, 0.0078125
        %v790 = vmul.f32 %v750, 0.0078125
        %v791 = vmul.f32 %v752, 0.0078125
        %v792 = vmul.f32 %v754, 0.0078125
        %v793 = vmul.f32 %v756, 0.0078125
        %v794 = vmul.f32 %v758, 0.0078125
        %v795 = vmul.f32 %v760, 0.0078125
        %v796 = vmul.f32 %v762, 0.0078125
        %v797 = vmul.f32 %v764, 0.0078125
        %v798 = vmul.f32 %v766, 0.0078125
        %v799 = vsub.f32 %v669, %v767
        %v800 = vsub.f32 %v670, %v768
        %v801 = vsub.f32 %v671, %v769
        %v802 = vsub.f32 %v672, %v770
        %v803 = vsub.f32 %v673, %v771
        %v804 = vsub.f32 %v674, %v772
        %v805 = vsub.f32 %v675, %v773
        %v806 = vsub.f32 %v676, %v774
        %v807 = vsub.f32 %v677, %v775
        %v808 = vsub.f32 %v678, %v776
        %v809 = vsub.f32 %v679, %v777
        %v810 = vsub.f32 %v680, %v778
        %v811 = vsub.f32 %v681, %v779
        %v812 = vsub.f32 %v682, %v780
        %v813 = vsub.f32 %v683, %v781
        %v814 = vsub.f32 %v684, %v782
        %v815 = vsub.f32 %v685, %v783
        %v816 = vsub.f32 %v686, %v784
        %v817 = vsub.f32 %v687, %v785
        %v818 = vsub.f32 %v688, %v786
        %v819 = vsub.f32 %v689, %v787
        %v820 = vsub.f32 %v690, %v788
        %v821 = vsub.f32 %v691, %v789
        %v822 = vsub.f32 %v692, %v790
        %v823 = vsub.f32 %v693, %v791
        %v824 = vsub.f32 %v694, %v792
        %v825 = vsub.f32 %v695, %v793
        %v826 = vsub.f32 %v696, %v794
        %v827 = vsub.f32 %v697, %v795
        %v828 = vsub.f32 %v698, %v796
        %v829 = vsub.f32 %v699, %v797
        %v830 = vsub.f32 %v700, %v798
        %v831 = vmul.f32 %v799, %v799
        %v832 = vmul.f32 %v800, %v800
        %v833 = vmul.f32 %v801, %v801
        %v834 = vmul.f32 %v802, %v802
        %v835 = vmul.f32 %v803, %v803
        %v836 = vmul.f32 %v804, %v804
        %v837 = vmul.f32 %v805, %v805
        %v838 = vmul.f32 %v806, %v806
        %v839 = vmul.f32 %v807, %v807
        %v840 = vmul.f32 %v808, %v808
        %v841 = vmul.f32 %v809, %v809
        %v842 = vmul.f32 %v810, %v810
        %v843 = vmul.f32 %v811, %v811
        %v844 = vmul.f32 %v812, %v812
        %v845 = vmul.f32 %v813, %v813
        %v846 = vmul.f32 %v814, %v814
        %v847 = vmul.f32 %v815, %v815
        %v848 = vmul.f32 %v816, %v816
        %v849 = vmul.f32 %v817, %v817
        %v850 = vmul.f32 %v818, %v818
        %v851 = vmul.f32 %v819, %v819
        %v852 = vmul.f32 %v820, %v820
        %v853 = vmul.f32 %v821, %v821
        %v854 = vmul.f32 %v822, %v822
        %v855 = vmul.f32 %v823, %v823
        %v856 = vmul.f32 %v824, %v824
        %v857 = vmul.f32 %v825, %v825
        %v858 = vmul.f32 %v826, %v826
        %v859 = vmul.f32 %v827, %v827
        %v860 = vmul.f32 %v828, %v828
        %v861 = vmul.f32 %v829, %v829
        %v862 = vmul.f32 %v830, %v830
        %863 = vadd.xlane.f32.xlu0 %v831
        %v864 = vpop.xlane.xlu0 %863
        %865 = vadd.xlane.f32.xlu0 %v832
        %v866 = vpop.xlane.xlu0 %865
        %867 = vadd.xlane.f32.xlu0 %v833
        %v868 = vpop.xlane.xlu0 %867
        %869 = vadd.xlane.f32.xlu0 %v834
        %v870 = vpop.xlane.xlu0 %869
        %871 = vadd.xlane.f32.xlu0 %v835
        %v872 = vpop.xlane.xlu0 %871
        %873 = vadd.xlane.f32.xlu0 %v836
        %v874 = vpop.xlane.xlu0 %873
        %875 = vadd.xlane.f32.xlu0 %v837
        %v876 = vpop.xlane.xlu0 %875
        %877 = vadd.xlane.f32.xlu0 %v838
        %v878 = vpop.xlane.xlu0 %877
        %879 = vadd.xlane.f32.xlu0 %v839
        %v880 = vpop.xlane.xlu0 %879
        %881 = vadd.xlane.f32.xlu0 %v840
        %v882 = vpop.xlane.xlu0 %881
        %883 = vadd.xlane.f32.xlu0 %v841
        %v884 = vpop.xlane.xlu0 %883
        %885 = vadd.xlane.f32.xlu0 %v842
        %v886 = vpop.xlane.xlu0 %885
        %887 = vadd.xlane.f32.xlu0 %v843
        %v888 = vpop.xlane.xlu0 %887
        %889 = vadd.xlane.f32.xlu0 %v844
        %v890 = vpop.xlane.xlu0 %889
        %891 = vadd.xlane.f32.xlu0 %v845
        %v892 = vpop.xlane.xlu0 %891
        %893 = vadd.xlane.f32.xlu0 %v846
        %v894 = vpop.xlane.xlu0 %893
        %895 = vadd.xlane.f32.xlu0 %v847
        %v896 = vpop.xlane.xlu0 %895
        %897 = vadd.xlane.f32.xlu0 %v848
        %v898 = vpop.xlane.xlu0 %897
        %899 = vadd.xlane.f32.xlu0 %v849
        %v900 = vpop.xlane.xlu0 %899
        %901 = vadd.xlane.f32.xlu0 %v850
        %v902 = vpop.xlane.xlu0 %901
        %903 = vadd.xlane.f32.xlu0 %v851
        %v904 = vpop.xlane.xlu0 %903
        %905 = vadd.xlane.f32.xlu0 %v852
        %v906 = vpop.xlane.xlu0 %905
        %907 = vadd.xlane.f32.xlu0 %v853
        %v908 = vpop.xlane.xlu0 %907
        %909 = vadd.xlane.f32.xlu0 %v854
        %v910 = vpop.xlane.xlu0 %909
        %911 = vadd.xlane.f32.xlu0 %v855
        %v912 = vpop.xlane.xlu0 %911
        %913 = vadd.xlane.f32.xlu0 %v856
        %v914 = vpop.xlane.xlu0 %913
        %915 = vadd.xlane.f32.xlu0 %v857
        %v916 = vpop.xlane.xlu0 %915
        %917 = vadd.xlane.f32.xlu0 %v858
        %v918 = vpop.xlane.xlu0 %917
        %919 = vadd.xlane.f32.xlu0 %v859
        %v920 = vpop.xlane.xlu0 %919
        %921 = vadd.xlane.f32.xlu0 %v860
        %v922 = vpop.xlane.xlu0 %921
        %923 = vadd.xlane.f32.xlu0 %v861
        %v924 = vpop.xlane.xlu0 %923
        %925 = vadd.xlane.f32.xlu0 %v862
        %v926 = vpop.xlane.xlu0 %925
        %v927 = vmul.f32 %v864, 0.0078125
        %v928 = vmul.f32 %v866, 0.0078125
        %v929 = vmul.f32 %v868, 0.0078125
        %v930 = vmul.f32 %v870, 0.0078125
        %v931 = vmul.f32 %v872, 0.0078125
        %v932 = vmul.f32 %v874, 0.0078125
        %v933 = vmul.f32 %v876, 0.0078125
        %v934 = vmul.f32 %v878, 0.0078125
        %v935 = vmul.f32 %v880, 0.0078125
        %v936 = vmul.f32 %v882, 0.0078125
        %v937 = vmul.f32 %v884, 0.0078125
        %v938 = vmul.f32 %v886, 0.0078125
        %v939 = vmul.f32 %v888, 0.0078125
        %v940 = vmul.f32 %v890, 0.0078125
        %v941 = vmul.f32 %v892, 0.0078125
        %v942 = vmul.f32 %v894, 0.0078125
        %v943 = vmul.f32 %v896, 0.0078125
        %v944 = vmul.f32 %v898, 0.0078125
        %v945 = vmul.f32 %v900, 0.0078125
        %v946 = vmul.f32 %v902, 0.0078125
        %v947 = vmul.f32 %v904, 0.0078125
        %v948 = vmul.f32 %v906, 0.0078125
        %v949 = vmul.f32 %v908, 0.0078125
        %v950 = vmul.f32 %v910, 0.0078125
        %v951 = vmul.f32 %v912, 0.0078125
        %v952 = vmul.f32 %v914, 0.0078125
        %v953 = vmul.f32 %v916, 0.0078125
        %v954 = vmul.f32 %v918, 0.0078125
        %v955 = vmul.f32 %v920, 0.0078125
        %v956 = vmul.f32 %v922, 0.0078125
        %v957 = vmul.f32 %v924, 0.0078125
        %v958 = vmul.f32 %v926, 0.0078125
        %v959 = vadd.f32 %v927, 1e-05
        %v960 = vadd.f32 %v928, 1e-05
        %v961 = vadd.f32 %v929, 1e-05
        %v962 = vadd.f32 %v930, 1e-05
        %v963 = vadd.f32 %v931, 1e-05
        %v964 = vadd.f32 %v932, 1e-05
        %v965 = vadd.f32 %v933, 1e-05
        %v966 = vadd.f32 %v934, 1e-05
        %v967 = vadd.f32 %v935, 1e-05
        %v968 = vadd.f32 %v936, 1e-05
        %v969 = vadd.f32 %v937, 1e-05
        %v970 = vadd.f32 %v938, 1e-05
        %v971 = vadd.f32 %v939, 1e-05
        %v972 = vadd.f32 %v940, 1e-05
        %v973 = vadd.f32 %v941, 1e-05
        %v974 = vadd.f32 %v942, 1e-05
        %v975 = vadd.f32 %v943, 1e-05
        %v976 = vadd.f32 %v944, 1e-05
        %v977 = vadd.f32 %v945, 1e-05
        %v978 = vadd.f32 %v946, 1e-05
        %v979 = vadd.f32 %v947, 1e-05
        %v980 = vadd.f32 %v948, 1e-05
        %v981 = vadd.f32 %v949, 1e-05
        %v982 = vadd.f32 %v950, 1e-05
        %v983 = vadd.f32 %v951, 1e-05
        %v984 = vadd.f32 %v952, 1e-05
        %v985 = vadd.f32 %v953, 1e-05
        %v986 = vadd.f32 %v954, 1e-05
        %v987 = vadd.f32 %v955, 1e-05
        %v988 = vadd.f32 %v956, 1e-05
        %v989 = vadd.f32 %v957, 1e-05
        %v990 = vadd.f32 %v958, 1e-05
        %v991 = vrsqrt.pop %v959
        %v992 = vrsqrt.pop %v960
        %v993 = vrsqrt.pop %v961
        %v994 = vrsqrt.pop %v962
        %v995 = vrsqrt.pop %v963
        %v996 = vrsqrt.pop %v964
        %v997 = vrsqrt.pop %v965
        %v998 = vrsqrt.pop %v966
        %v999 = vrsqrt.pop %v967
        %v1000 = vrsqrt.pop %v968
        %v1001 = vrsqrt.pop %v969
        %v1002 = vrsqrt.pop %v970
        %v1003 = vrsqrt.pop %v971
        %v1004 = vrsqrt.pop %v972
        %v1005 = vrsqrt.pop %v973
        %v1006 = vrsqrt.pop %v974
        %v1007 = vrsqrt.pop %v975
        %v1008 = vrsqrt.pop %v976
        %v1009 = vrsqrt.pop %v977
        %v1010 = vrsqrt.pop %v978
        %v1011 = vrsqrt.pop %v979
        %v1012 = vrsqrt.pop %v980
        %v1013 = vrsqrt.pop %v981
        %v1014 = vrsqrt.pop %v982
        %v1015 = vrsqrt.pop %v983
        %v1016 = vrsqrt.pop %v984
        %v1017 = vrsqrt.pop %v985
        %v1018 = vrsqrt.pop %v986
        %v1019 = vrsqrt.pop %v987
        %v1020 = vrsqrt.pop %v988
        %v1021 = vrsqrt.pop %v989
        %v1022 = vrsqrt.pop %v990
        %v1023 = vmul.f32 %v799, %v991
        %v1024 = vmul.f32 %v800, %v992
        %v1025 = vmul.f32 %v801, %v993
        %v1026 = vmul.f32 %v802, %v994
        %v1027 = vmul.f32 %v803, %v995
        %v1028 = vmul.f32 %v804, %v996
        %v1029 = vmul.f32 %v805, %v997
        %v1030 = vmul.f32 %v806, %v998
        %v1031 = vmul.f32 %v807, %v999
        %v1032 = vmul.f32 %v808, %v1000
        %v1033 = vmul.f32 %v809, %v1001
        %v1034 = vmul.f32 %v810, %v1002
        %v1035 = vmul.f32 %v811, %v1003
        %v1036 = vmul.f32 %v812, %v1004
        %v1037 = vmul.f32 %v813, %v1005
        %v1038 = vmul.f32 %v814, %v1006
        %v1039 = vmul.f32 %v815, %v1007
        %v1040 = vmul.f32 %v816, %v1008
        %v1041 = vmul.f32 %v817, %v1009
        %v1042 = vmul.f32 %v818, %v1010
        %v1043 = vmul.f32 %v819, %v1011
        %v1044 = vmul.f32 %v820, %v1012
        %v1045 = vmul.f32 %v821, %v1013
        %v1046 = vmul.f32 %v822, %v1014
        %v1047 = vmul.f32 %v823, %v1015
        %v1048 = vmul.f32 %v824, %v1016
        %v1049 = vmul.f32 %v825, %v1017
        %v1050 = vmul.f32 %v826, %v1018
        %v1051 = vmul.f32 %v827, %v1019
        %v1052 = vmul.f32 %v828, %v1020
        %v1053 = vmul.f32 %v829, %v1021
        %v1054 = vmul.f32 %v830, %v1022
        %v1056 = vlaneseq
        %v1057 = vshrl.u32 %v1056, 7
        %v1058 = vsub.s32 0, %v1057
        %v1059 = vrot.slane %v701, %v1058
        %v1061 = vmul.f32 %v1023, %v1059
        %v1062 = vmul.f32 %v1024, %v1059
        %v1063 = vmul.f32 %v1025, %v1059
        %v1064 = vmul.f32 %v1026, %v1059
        %v1065 = vmul.f32 %v1027, %v1059
        %v1066 = vmul.f32 %v1028, %v1059
        %v1067 = vmul.f32 %v1029, %v1059
        %v1068 = vmul.f32 %v1030, %v1059
        %v1069 = vmul.f32 %v1031, %v1059
        %v1070 = vmul.f32 %v1032, %v1059
        %v1071 = vmul.f32 %v1033, %v1059
        %v1072 = vmul.f32 %v1034, %v1059
        %v1073 = vmul.f32 %v1035, %v1059
        %v1074 = vmul.f32 %v1036, %v1059
        %v1075 = vmul.f32 %v1037, %v1059
        %v1076 = vmul.f32 %v1038, %v1059
        %v1077 = vmul.f32 %v1039, %v1059
        %v1078 = vmul.f32 %v1040, %v1059
        %v1079 = vmul.f32 %v1041, %v1059
        %v1080 = vmul.f32 %v1042, %v1059
        %v1081 = vmul.f32 %v1043, %v1059
        %v1082 = vmul.f32 %v1044, %v1059
        %v1083 = vmul.f32 %v1045, %v1059
        %v1084 = vmul.f32 %v1046, %v1059
        %v1085 = vmul.f32 %v1047, %v1059
        %v1086 = vmul.f32 %v1048, %v1059
        %v1087 = vmul.f32 %v1049, %v1059
        %v1088 = vmul.f32 %v1050, %v1059
        %v1089 = vmul.f32 %v1051, %v1059
        %v1090 = vmul.f32 %v1052, %v1059
        %v1091 = vmul.f32 %v1053, %v1059
        %v1092 = vmul.f32 %v1054, %v1059
        %v1094 = vlaneseq
        %v1095 = vshrl.u32 %v1094, 7
        %v1096 = vsub.s32 0, %v1095
        %v1097 = vrot.slane %v702, %v1096
        %v1099 = vadd.f32 %v1061, %v1097
        %v1100 = vadd.f32 %v1062, %v1097
        %v1101 = vadd.f32 %v1063, %v1097
        %v1102 = vadd.f32 %v1064, %v1097
        %v1103 = vadd.f32 %v1065, %v1097
        %v1104 = vadd.f32 %v1066, %v1097
        %v1105 = vadd.f32 %v1067, %v1097
        %v1106 = vadd.f32 %v1068, %v1097
        %v1107 = vadd.f32 %v1069, %v1097
        %v1108 = vadd.f32 %v1070, %v1097
        %v1109 = vadd.f32 %v1071, %v1097
        %v1110 = vadd.f32 %v1072, %v1097
        %v1111 = vadd.f32 %v1073, %v1097
        %v1112 = vadd.f32 %v1074, %v1097
        %v1113 = vadd.f32 %v1075, %v1097
        %v1114 = vadd.f32 %v1076, %v1097
        %v1115 = vadd.f32 %v1077, %v1097
        %v1116 = vadd.f32 %v1078, %v1097
        %v1117 = vadd.f32 %v1079, %v1097
        %v1118 = vadd.f32 %v1080, %v1097
        %v1119 = vadd.f32 %v1081, %v1097
        %v1120 = vadd.f32 %v1082, %v1097
        %v1121 = vadd.f32 %v1083, %v1097
        %v1122 = vadd.f32 %v1084, %v1097
        %v1123 = vadd.f32 %v1085, %v1097
        %v1124 = vadd.f32 %v1086, %v1097
        %v1125 = vadd.f32 %v1087, %v1097
        %v1126 = vadd.f32 %v1088, %v1097
        %v1127 = vadd.f32 %v1089, %v1097
        %v1128 = vadd.f32 %v1090, %v1097
        %v1129 = vadd.f32 %v1091, %v1097
        %v1130 = vadd.f32 %v1092, %v1097
        %v1131 = vadd.f32 %v261, %v1099
        %v1132 = vadd.f32 %v262, %v1100
        %v1133 = vadd.f32 %v263, %v1101
        %v1134 = vadd.f32 %v264, %v1102
        %v1135 = vadd.f32 %v265, %v1103
        %v1136 = vadd.f32 %v266, %v1104
        %v1137 = vadd.f32 %v267, %v1105
        %v1138 = vadd.f32 %v268, %v1106
        %v1139 = vadd.f32 %v269, %v1107
        %v1140 = vadd.f32 %v270, %v1108
        %v1141 = vadd.f32 %v271, %v1109
        %v1142 = vadd.f32 %v272, %v1110
        %v1143 = vadd.f32 %v273, %v1111
        %v1144 = vadd.f32 %v274, %v1112
        %v1145 = vadd.f32 %v275, %v1113
        %v1146 = vadd.f32 %v276, %v1114
        %v1147 = vadd.f32 %v277, %v1115
        %v1148 = vadd.f32 %v278, %v1116
        %v1149 = vadd.f32 %v279, %v1117
        %v1150 = vadd.f32 %v280, %v1118
        %v1151 = vadd.f32 %v281, %v1119
        %v1152 = vadd.f32 %v282, %v1120
        %v1153 = vadd.f32 %v283, %v1121
        %v1154 = vadd.f32 %v284, %v1122
        %v1155 = vadd.f32 %v285, %v1123
        %v1156 = vadd.f32 %v286, %v1124
        %v1157 = vadd.f32 %v287, %v1125
        %v1158 = vadd.f32 %v288, %v1126
        %v1159 = vadd.f32 %v289, %v1127
        %v1160 = vadd.f32 %v290, %v1128
        %v1161 = vadd.f32 %v291, %v1129
        %v1162 = vadd.f32 %v292, %v1130
        %1163 = vst [vmem:[%s257] sm:$0xff] %v1131
        %1164 = vst [vmem:[%s257 + $0x8] sm:$0xff] %v1132
        %1165 = vst [vmem:[%s257 + $0x10] sm:$0xff] %v1133
        %1166 = vst [vmem:[%s257 + $0x18] sm:$0xff] %v1134
        %1167 = vst [vmem:[%s257 + $0x20] sm:$0xff] %v1135
        %1168 = vst [vmem:[%s257 + $0x28] sm:$0xff] %v1136
        %1169 = vst [vmem:[%s257 + $0x30] sm:$0xff] %v1137
        %1170 = vst [vmem:[%s257 + $0x38] sm:$0xff] %v1138
        %1171 = vst [vmem:[%s257 + $0x40] sm:$0xff] %v1139
        %1172 = vst [vmem:[%s257 + $0x48] sm:$0xff] %v1140
        %1173 = vst [vmem:[%s257 + $0x50] sm:$0xff] %v1141
        %1174 = vst [vmem:[%s257 + $0x58] sm:$0xff] %v1142
        %1175 = vst [vmem:[%s257 + $0x60] sm:$0xff] %v1143
        %1176 = vst [vmem:[%s257 + $0x68] sm:$0xff] %v1144
        %1177 = vst [vmem:[%s257 + $0x70] sm:$0xff] %v1145
        %1178 = vst [vmem:[%s257 + $0x78] sm:$0xff] %v1146
        %1179 = vst [vmem:[%s257 + $0x80] sm:$0xff] %v1147
        %1180 = vst [vmem:[%s257 + $0x88] sm:$0xff] %v1148
        %1181 = vst [vmem:[%s257 + $0x90] sm:$0xff] %v1149
        %1182 = vst [vmem:[%s257 + $0x98] sm:$0xff] %v1150
        %1183 = vst [vmem:[%s257 + $0xa0] sm:$0xff] %v1151
        %1184 = vst [vmem:[%s257 + $0xa8] sm:$0xff] %v1152
        %1185 = vst [vmem:[%s257 + $0xb0] sm:$0xff] %v1153
        %1186 = vst [vmem:[%s257 + $0xb8] sm:$0xff] %v1154
        %1187 = vst [vmem:[%s257 + $0xc0] sm:$0xff] %v1155
        %1188 = vst [vmem:[%s257 + $0xc8] sm:$0xff] %v1156
        %1189 = vst [vmem:[%s257 + $0xd0] sm:$0xff] %v1157
        %1190 = vst [vmem:[%s257 + $0xd8] sm:$0xff] %v1158
        %1191 = vst [vmem:[%s257 + $0xe0] sm:$0xff] %v1159
        %1192 = vst [vmem:[%s257 + $0xe8] sm:$0xff] %v1160
        %1193 = vst [vmem:[%s257 + $0xf0] sm:$0xff] %v1161
        %1194 = vst [vmem:[%s257 + $0xf8] sm:$0xff] %v1162
        %s1195 = sand.u32 %s141, 1
        %s1196 = scalar_lea.sflag [#allocation4], %s1195
        %s1197 = sand.u32 %s141, 1
        %s1198 = smul.addr %s1197, 256
        %s1199 = scalar_lea.vmem [#allocation7], %s1198
        // Predicated region
        $region49: #{tpu_custom_call.1} parent=39 // pred_check
          %p1200 = pneg %p151
        $region50: #{tpu_custom_call.1} parent=39 // pred_check_branch
          %1202 = sbr.rel (%p1200) target = $region52
        $region51: #{tpu_custom_call.1} parent=39 // pred_region
          %s1203 = smul.u32 32, %s23
          %s1205 = ssub.s32 4096, 4096
          %1206 = vsyncadd %s1196, %s1205
          %s1207 = smul.addr %s1203, 128
          %s1208 = scalar_lea.hbm %s5, %s1207
          %s1209 = sshll.u32 %s1199, 4
          %s1210 = int_to_ptr.vmem [resolvable:$true] %s1209
          %1215 = dma.vmem_to_hbm [thread:$0]  %s1210, 4096, %s1208, %s1196, 128, 128, 8
        $region52: #{tpu_custom_call.1} parent=39 // pred_fallthru
          _
      $region40: #{tpu_custom_call.1} parent=5 // pred_fallthru
        _
      %p1216 = scmp.le.s32.totalorder 2, %s18
      // Predicated region
      $region53: #{tpu_custom_call.1} parent=5 // pred_check
        %p1217 = pneg %p1216
      $region54: #{tpu_custom_call.1} parent=5 // pred_check_branch
        %1219 = sbr.rel (%p1217) target = $region56
      $region55: #{tpu_custom_call.1} parent=5 // pred_region
        %s1220 = ssub.s32 %s18, 2
        // Predicated region
        $region57: #{tpu_custom_call.1} parent=55 // pred_check
          %p1221 = pneg %p157
        $region58: #{tpu_custom_call.1} parent=55 // pred_check_branch
          %1223 = sbr.rel (%p1221) target = $region60
        $region59: #{tpu_custom_call.1} parent=55 // pred_region
          %s1224 = sand.u32 %s142, 1
          %s1225 = scalar_lea.sflag [#allocation4], %s1224
          %s1226 = sand.u32 %s142, 1
          %s1227 = smul.addr %s1226, 256
          %s1228 = scalar_lea.vmem [#allocation7], %s1227
          %1229 = dma.done %s1225, 4096
        $region60: #{tpu_custom_call.1} parent=55 // pred_fallthru
          _
      $region56: #{tpu_custom_call.1} parent=5 // pred_fallthru
        _
    $region6: #{tpu_custom_call.1} parent=1 // loop_footer
      %s22 = sadd.s32 1, %s18
    $region7: #{tpu_custom_call.1} parent=1 // loop_footer_branch
      %17 = sbr.rel target = $region3
    $region8: #{tpu_custom_call.1} parent=1 // loop_exit
      _
    %1230 = vsyncpa [#allocation3], 1
    %s1231 = scalar_lea.sflag [#allocation3], 1
    %1232 = vsyncpa %s1231, 1
    %1233 = vsyncpa [#allocation6], 1
    %1234 = vsyncpa [#allocation4], 1
    %s1235 = scalar_lea.sflag [#allocation4], 1
    %1236 = vsyncpa %s1235, 1

// kernel: tpu_custom_call.1
$region0: #{tpu_custom_call.1}
  #allocation0 [shape = 'u32[]', space=smem, size = 0x4, offset = 0x4, fixed_abs, tag = 'smem constant byte address 0x4 - core index']
  #allocation1 [shape = 'u32[144,128]{1,0:T(1,128)}', space=vmem, size = 0x12000, scoped, tag = 'internal scratch']
  %s0 = inlined_call_operand.hbm [shape: f32[512,128], index: 0, kind: input, shape index: {}]
  %s1 = inlined_call_operand.hbm [shape: bf16[128,128], index: 1, kind: input, shape index: {}]
  %s2 = inlined_call_operand.vmem [shape: f32[1,128], index: 2, kind: input, shape index: {}]
  %s3 = inlined_call_operand.vmem [shape: f32[1,128], index: 3, kind: input, shape index: {}]
  %s4 = inlined_call_operand.vmem [shape: f32[1,128], index: 4, kind: input, shape index: {}]
  %s5 = inlined_call_operand.hbm [shape: f32[512,128], index: 5, kind: output, shape index: {}]
  %s6 = sld [smem:[#allocation0]]
  $region61: #{tpu_custom_call.1} parent=0
    _
  %s8 = ssub.s32 1, %s6
  %s9 = scalar_select 0, %s8, %s6
  $region1: #{tpu_custom_call.1} parent=0
    #allocation2 [shape = 'u8[262144]{0}', space=vmem, size = 0x40000, scoped, tag = 'input window, operand 0']
    #allocation3 [shape = 's32[2]{0}', space=sflag, size = 0x8, scoped, tag = 'scoped memory for tpu_custom_call.1']
    #allocation4 [shape = 's32[2]{0}', space=sflag, size = 0x8, scoped, tag = 'scoped memory for tpu_custom_call.1']
    #allocation5 [shape = 'u8[32768]{0}', space=vmem, size = 0x8000, scoped, tag = 'input window, operand 1, single buffered']
    #allocation6 [shape = 's32[1]{0}', space=sflag, size = 0x4, scoped, tag = 'scoped memory for tpu_custom_call.1']
    #allocation7 [shape = 'u8[262144]{0}', space=vmem, size = 0x40000, scoped, tag = 'output window, operand 0']
    %10 = vsyncpa [#allocation3], 0
    %s11 = scalar_lea.sflag [#allocation3], 1
    %12 = vsyncpa %s11, 0
    %13 = vsyncpa [#allocation6], 0
    %14 = vsyncpa [#allocation4], 0
    %s15 = scalar_lea.sflag [#allocation4], 1
    %16 = vsyncpa %s15, 0
    loop: start=0, step=1, limit=4
    $region2: #{tpu_custom_call.1} parent=1 // loop_pre_header
      _
    $region3: #{tpu_custom_call.1} parent=1 // loop_header
      %s18 = sphi 0, %s22
      %p19 = scmp.ge.s32.totalorder %s18, 4
      %s28 = sphi 0, %s30
      %s31 = sphi 0, %s28
      %s32 = sphi 0, %s31
      %s48 = sphi 0, %s32
      %s52 = sphi 0, %s52
      %s54 = sphi 0, %s52
      %s55 = sphi 0, %s54
      %s69 = sphi 0, %s55
      %s73 = sphi 0, %s73
      %s75 = sphi 0, %s73
      %s76 = sphi 0, %s75
      %s90 = sphi 0, %s76
      %s94 = sphi 0, %s94
      %s96 = sphi 0, %s94
      %s97 = sphi 0, %s96
      %s111 = sphi 0, %s97
      %s115 = sphi 0, %s115
      %s117 = sphi 0, %s115
      %s118 = sphi 0, %s117
      %s132 = sphi 0, %s118
      %s138 = sphi 0, %s140
      %s141 = sphi 0, %s138
      %s142 = sphi 0, %s141
      %s158 = sphi 0, %s142
    $region4: #{tpu_custom_call.1} parent=1 // loop_header_branch
      %21 = sbr.rel (%p19) target = $region8
    $region5: #{tpu_custom_call.1} parent=1 // loop_body
      %s23 = ssub.s32 %s18, 1
      %s24 = ssub.s32 %s18, 2
      %s25 = sadd.s32 %s18, 1
      %s26 = ssub.s32 %s18, %s25
      %p27 = scmp.eq.s32.totalorder %s26, 0
      %s29 = sadd.s32 %s28, 1
      %s30 = scalar_select %p27, %s28, %s29
      %p33 = pneg %p27
      %p34 = scmp.eq.s32.totalorder %s18, 1
      %p35 = por %p33, %p34
      %p36 = scmp.ne.s32.totalorder %s28, %s31
      %p37 = scmp.eq.s32.totalorder %s18, 0
      %p38 = por %p36, %p37
      %p39 = scmp.ne.s32.totalorder %s28, %s31
      %p40 = scmp.eq.s32.totalorder %s23, 1
      %p41 = por %p39, %p40
      %p42 = scmp.ne.s32.totalorder %s31, %s32
      %p43 = scmp.eq.s32.totalorder %s23, 0
      %p44 = por %p42, %p43
      %p45 = scmp.ne.s32.totalorder %s31, %s32
      %p46 = scmp.eq.s32.totalorder %s24, 1
      %p47 = por %p45, %p46
      %p49 = scmp.ne.s32.totalorder %s32, %s48
      %p50 = scmp.eq.s32.totalorder %s24, 0
      %p51 = por %p49, %p50
      %s53 = sadd.s32 %s52, 1
      %p56 = scmp.eq.s32.totalorder %s18, 1
      %p57 = scmp.ne.s32.totalorder %s52, %s54
      %p58 = scmp.eq.s32.totalorder %s18, 0
      %p59 = por %p57, %p58
      %p60 = scmp.ne.s32.totalorder %s52, %s54
      %p61 = scmp.eq.s32.totalorder %s23, 1
      %p62 = por %p60, %p61
      %p63 = scmp.ne.s32.totalorder %s54, %s55
      %p64 = scmp.eq.s32.totalorder %s23, 0
      %p65 = por %p63, %p64
      %p66 = scmp.ne.s32.totalorder %s54, %s55
      %p67 = scmp.eq.s32.totalorder %s24, 1
      %p68 = por %p66, %p67
      %p70 = scmp.ne.s32.totalorder %s55, %s69
      %p71 = scmp.eq.s32.totalorder %s24, 0
      %p72 = por %p70, %p71
      %s74 = sadd.s32 %s73, 1
      %p77 = scmp.eq.s32.totalorder %s18, 1
      %p78 = scmp.ne.s32.totalorder %s73, %s75
      %p79 = scmp.eq.s32.totalorder %s18, 0
      %p80 = por %p78, %p79
      %p81 = scmp.ne.s32.totalorder %s73, %s75
      %p82 = scmp.eq.s32.totalorder %s23, 1
      %p83 = por %p81, %p82
      %p84 = scmp.ne.s32.totalorder %s75, %s76
      %p85 = scmp.eq.s32.totalorder %s23, 0
      %p86 = por %p84, %p85
      %p87 = scmp.ne.s32.totalorder %s75, %s76
      %p88 = scmp.eq.s32.totalorder %s24, 1
      %p89 = por %p87, %p88
      %p91 = scmp.ne.s32.totalorder %s76, %s90
      %p92 = scmp.eq.s32.totalorder %s24, 0
      %p93 = por %p91, %p92
      %s95 = sadd.s32 %s94, 1
      %p98 = scmp.eq.s32.totalorder %s18, 1
      %p99 = scmp.ne.s32.totalorder %s94, %s96
      %p100 = scmp.eq.s32.totalorder %s18, 0
      %p101 = por %p99, %p100
      %p102 = scmp.ne.s32.totalorder %s94, %s96
      %p103 = scmp.eq.s32.totalorder %s23, 1
      %p104 = por %p102, %p103
      %p105 = scmp.ne.s32.totalorder %s96, %s97
      %p106 = scmp.eq.s32.totalorder %s23, 0
      %p107 = por %p105, %p106
      %p108 = scmp.ne.s32.totalorder %s96, %s97
      %p109 = scmp.eq.s32.totalorder %s24, 1
      %p110 = por %p108, %p109
      %p112 = scmp.ne.s32.totalorder %s97, %s111
      %p113 = scmp.eq.s32.totalorder %s24, 0
      %p114 = por %p112, %p113
      %s116 = sadd.s32 %s115, 1
      %p119 = scmp.eq.s32.totalorder %s18, 1
      %p120 = scmp.ne.s32.totalorder %s115, %s117
      %p121 = scmp.eq.s32.totalorder %s18, 0
      %p122 = por %p120, %p121
      %p123 = scmp.ne.s32.totalorder %s115, %s117
      %p124 = scmp.eq.s32.totalorder %s23, 1
      %p125 = por %p123, %p124
      %p126 = scmp.ne.s32.totalorder %s117, %s118
      %p127 = scmp.eq.s32.totalorder %s23, 0
      %p128 = por %p126, %p127
      %p129 = scmp.ne.s32.totalorder %s117, %s118
      %p130 = scmp.eq.s32.totalorder %s24, 1
      %p131 = por %p129, %p130
      %p133 = scmp.ne.s32.totalorder %s118, %s132
      %p134 = scmp.eq.s32.totalorder %s24, 0
      %p135 = por %p133, %p134
      %s136 = ssub.s32 %s18, %s25
      %p137 = scmp.eq.s32.totalorder %s136, 0
      %s139 = sadd.s32 %s138, 1
      %s140 = scalar_select %p137, %s138, %s139
      %p143 = pneg %p137
      %p144 = scmp.eq.s32.totalorder %s18, 1
      %p145 = por %p143, %p144
      %p146 = scmp.ne.s32.totalorder %s138, %s141
      %p147 = scmp.eq.s32.totalorder %s18, 0
      %p148 = por %p146, %p147
      %p149 = scmp.ne.s32.totalorder %s138, %s141
      %p150 = scmp.eq.s32.totalorder %s23, 1
      %p151 = por %p149, %p150
      %p152 = scmp.ne.s32.totalorder %s141, %s142
      %p153 = scmp.eq.s32.totalorder %s23, 0
      %p154 = por %p152, %p153
      %p155 = scmp.ne.s32.totalorder %s141, %s142
      %p156 = scmp.eq.s32.totalorder %s24, 1
      %p157 = por %p155, %p156
      %p159 = scmp.ne.s32.totalorder %s142, %s158
      %p160 = scmp.eq.s32.totalorder %s24, 0
      %p161 = por %p159, %p160
      %p162 = scmp.le.s32.totalorder 1, %s18
      %p163 = scmp.lt.s32.totalorder %s18, 3
      %p164 = pnand %p162, %p163
      %p165 = pneg %p164
      // Predicated region
      $region9: #{tpu_custom_call.1} parent=5 // pred_check
        _
      $region10: #{tpu_custom_call.1} parent=5 // pred_check_branch
        %167 = sbr.rel (%p164) target = $region12
      $region11: #{tpu_custom_call.1} parent=5 // pred_region
        %s168 = ssub.s32 %s18, 1
        // Predicated region
        $region13: #{tpu_custom_call.1} parent=11 // pred_check
          %p169 = pneg %p65
        $region14: #{tpu_custom_call.1} parent=11 // pred_check_branch
          %171 = sbr.rel (%p169) target = $region16
        $region15: #{tpu_custom_call.1} parent=11 // pred_region
          %s173 = ssub.s32 1024, 1024
          %174 = vsyncadd [#allocation6], %s173
          %s175 = sshll.u32 [#allocation5], 4
          %s176 = int_to_ptr.vmem [resolvable:$true] %s175
          %181 = dma.hbm_to_vmem [thread:$0]  %s1, 1024, %s176, [#allocation6], 64, 64, 4
        $region16: #{tpu_custom_call.1} parent=11 // pred_fallthru
          _
        // Predicated region
        $region17: #{tpu_custom_call.1} parent=11 // pred_check
          %p182 = pneg %p86
        $region18: #{tpu_custom_call.1} parent=11 // pred_check_branch
          %184 = sbr.rel (%p182) target = $region20
        $region19: #{tpu_custom_call.1} parent=11 // pred_region
          _
        $region20: #{tpu_custom_call.1} parent=11 // pred_fallthru
          _
        // Predicated region
        $region21: #{tpu_custom_call.1} parent=11 // pred_check
          %p185 = pneg %p107
        $region22: #{tpu_custom_call.1} parent=11 // pred_check_branch
          %187 = sbr.rel (%p185) target = $region24
        $region23: #{tpu_custom_call.1} parent=11 // pred_region
          _
        $region24: #{tpu_custom_call.1} parent=11 // pred_fallthru
          _
        // Predicated region
        $region25: #{tpu_custom_call.1} parent=11 // pred_check
          %p188 = pneg %p128
        $region26: #{tpu_custom_call.1} parent=11 // pred_check_branch
          %190 = sbr.rel (%p188) target = $region28
        $region27: #{tpu_custom_call.1} parent=11 // pred_region
          _
        $region28: #{tpu_custom_call.1} parent=11 // pred_fallthru
          _
      $region12: #{tpu_custom_call.1} parent=5 // pred_fallthru
        _
      %p191 = scmp.lt.s32.totalorder %s18, 2
      // Predicated region
      $region29: #{tpu_custom_call.1} parent=5 // pred_check
        %p192 = pneg %p191
      $region30: #{tpu_custom_call.1} parent=5 // pred_check_branch
        %194 = sbr.rel (%p192) target = $region32
      $region31: #{tpu_custom_call.1} parent=5 // pred_region
        // Predicated region
        $region33: #{tpu_custom_call.1} parent=31 // pred_check
          %p195 = pneg %p38
        $region34: #{tpu_custom_call.1} parent=31 // pred_check_branch
          %197 = sbr.rel (%p195) target = $region36
        $region35: #{tpu_custom_call.1} parent=31 // pred_region
          %s198 = sand.u32 %s28, 1
          %s199 = scalar_lea.sflag [#allocation3], %s198
          %s200 = sand.u32 %s28, 1
          %s201 = smul.addr %s200, 256
          %s202 = scalar_lea.vmem [#allocation2], %s201
          %s203 = smul.u32 32, %s18
          %s205 = ssub.s32 4096, 4096
          %206 = vsyncadd %s199, %s205
          %s207 = smul.addr %s203, 128
          %s208 = scalar_lea.hbm %s0, %s207
          %s209 = sshll.u32 %s202, 4
          %s210 = int_to_ptr.vmem [resolvable:$true] %s209
          %215 = dma.hbm_to_vmem [thread:$0]  %s208, 4096, %s210, %s199, 128, 128, 8
        $region36: #{tpu_custom_call.1} parent=31 // pred_fallthru
          _
      $region32: #{tpu_custom_call.1} parent=5 // pred_fallthru
        _
      %p216 = scmp.le.s32.totalorder 1, %s18
      %p217 = scmp.lt.s32.totalorder %s18, 3
      %p218 = pnand %p216, %p217
      %p219 = pneg %p218
      // Predicated region
      $region37: #{tpu_custom_call.1} parent=5 // pred_check
        _
      $region38: #{tpu_custom_call.1} parent=5 // pred_check_branch
        %221 = sbr.rel (%p218) target = $region40
      $region39: #{tpu_custom_call.1} parent=5 // pred_region
        %s222 = ssub.s32 %s18, 1
        %s223 = sand.u32 %s31, 1
        %s224 = scalar_lea.sflag [#allocation3], %s223
        %s225 = sand.u32 %s31, 1
        %s226 = smul.addr %s225, 256
        %s227 = scalar_lea.vmem [#allocation2], %s226
        // Predicated region
        $region41: #{tpu_custom_call.1} parent=39 // pred_check
          %p228 = pneg %p44
        $region42: #{tpu_custom_call.1} parent=39 // pred_check_branch
          %230 = sbr.rel (%p228) target = $region44
        $region43: #{tpu_custom_call.1} parent=39 // pred_region
          %231 = dma.done %s224, 4096
        $region44: #{tpu_custom_call.1} parent=39 // pred_fallthru
          _
        // Predicated region
        $region45: #{tpu_custom_call.1} parent=39 // pred_check
          %p232 = pneg %p65
        $region46: #{tpu_custom_call.1} parent=39 // pred_check_branch
          %234 = sbr.rel (%p232) target = $region48
        $region47: #{tpu_custom_call.1} parent=39 // pred_region
          %235 = dma.done [#allocation6], 1024
        $region48: #{tpu_custom_call.1} parent=39 // pred_fallthru
          _
        %s236 = sand.u32 %s31, 1
        %s237 = scalar_lea.sflag [#allocation3], %s236
        %s238 = sand.u32 %s31, 1
        %s239 = smul.addr %s238, 256
        %s240 = scalar_lea.vmem [#allocation2], %s239
        %p241 = pneg %p44
        %p242 = pneg %p41
        %p243 = pneg %p65
        %p244 = pneg %p62
        %p245 = pneg %p86
        %p246 = pneg %p83
        %p247 = pneg %p107
        %p248 = pneg %p104
        %p249 = pneg %p128
        %p250 = pneg %p125
        %p251 = pneg %p154
        %p252 = pneg %p151
        %s253 = sand.u32 %s141, 1
        %s254 = scalar_lea.sflag [#allocation4], %s253
        %s255 = sand.u32 %s141, 1
        %s256 = smul.addr %s255, 256
        %s257 = scalar_lea.vmem [#allocation7], %s256
        %s258 = smul.u32 32, %s23
        %s259 = smul.u32 32, %s23
        %v261 = vld [vmem:[%s227] sm:$0xff]
        %v262 = vld [vmem:[%s227 + $0x8] sm:$0xff]
        %v263 = vld [vmem:[%s227 + $0x10] sm:$0xff]
        %v264 = vld [vmem:[%s227 + $0x18] sm:$0xff]
        %v265 = vld [vmem:[%s227 + $0x20] sm:$0xff]
        %v266 = vld [vmem:[%s227 + $0x28] sm:$0xff]
        %v267 = vld [vmem:[%s227 + $0x30] sm:$0xff]
        %v268 = vld [vmem:[%s227 + $0x38] sm:$0xff]
        %v269 = vld [vmem:[%s227 + $0x40] sm:$0xff]
        %v270 = vld [vmem:[%s227 + $0x48] sm:$0xff]
        %v271 = vld [vmem:[%s227 + $0x50] sm:$0xff]
        %v272 = vld [vmem:[%s227 + $0x58] sm:$0xff]
        %v273 = vld [vmem:[%s227 + $0x60] sm:$0xff]
        %v274 = vld [vmem:[%s227 + $0x68] sm:$0xff]
        %v275 = vld [vmem:[%s227 + $0x70] sm:$0xff]
        %v276 = vld [vmem:[%s227 + $0x78] sm:$0xff]
        %v277 = vld [vmem:[%s227 + $0x80] sm:$0xff]
        %v278 = vld [vmem:[%s227 + $0x88] sm:$0xff]
        %v279 = vld [vmem:[%s227 + $0x90] sm:$0xff]
        %v280 = vld [vmem:[%s227 + $0x98] sm:$0xff]
        %v281 = vld [vmem:[%s227 + $0xa0] sm:$0xff]
        %v282 = vld [vmem:[%s227 + $0xa8] sm:$0xff]
        %v283 = vld [vmem:[%s227 + $0xb0] sm:$0xff]
        %v284 = vld [vmem:[%s227 + $0xb8] sm:$0xff]
        %v285 = vld [vmem:[%s227 + $0xc0] sm:$0xff]
        %v286 = vld [vmem:[%s227 + $0xc8] sm:$0xff]
        %v287 = vld [vmem:[%s227 + $0xd0] sm:$0xff]
        %v288 = vld [vmem:[%s227 + $0xd8] sm:$0xff]
        %v289 = vld [vmem:[%s227 + $0xe0] sm:$0xff]
        %v290 = vld [vmem:[%s227 + $0xe8] sm:$0xff]
        %v291 = vld [vmem:[%s227 + $0xf0] sm:$0xff]
        %v292 = vld [vmem:[%s227 + $0xf8] sm:$0xff]
        %v293 = vpack.c.bf16 %v262, %v261
        %v294 = vpack.c.bf16 %v264, %v263
        %v295 = vpack.c.bf16 %v266, %v265
        %v296 = vpack.c.bf16 %v268, %v267
        %v297 = vpack.c.bf16 %v270, %v269
        %v298 = vpack.c.bf16 %v272, %v271
        %v299 = vpack.c.bf16 %v274, %v273
        %v300 = vpack.c.bf16 %v276, %v275
        %v301 = vpack.c.bf16 %v278, %v277
        %v302 = vpack.c.bf16 %v280, %v279
        %v303 = vpack.c.bf16 %v282, %v281
        %v304 = vpack.c.bf16 %v284, %v283
        %v305 = vpack.c.bf16 %v286, %v285
        %v306 = vpack.c.bf16 %v288, %v287
        %v307 = vpack.c.bf16 %v290, %v289
        %v308 = vpack.c.bf16 %v292, %v291
        %v309 = vld [vmem:[#allocation5] sm:$0xf]
        %v310 = vld [vmem:[#allocation5 + $0x4] sm:$0xf]
        %v311 = vld [vmem:[#allocation5 + $0x8] sm:$0xf]
        %v312 = vld [vmem:[#allocation5 + $0xc] sm:$0xf]
        %v313 = vld [vmem:[#allocation5 + $0x10] sm:$0xf]
        %v314 = vld [vmem:[#allocation5 + $0x14] sm:$0xf]
        %v315 = vld [vmem:[#allocation5 + $0x18] sm:$0xf]
        %v316 = vld [vmem:[#allocation5 + $0x1c] sm:$0xf]
        %v317 = vld [vmem:[#allocation5 + $0x20] sm:$0xf]
        %v318 = vld [vmem:[#allocation5 + $0x24] sm:$0xf]
        %v319 = vld [vmem:[#allocation5 + $0x28] sm:$0xf]
        %v320 = vld [vmem:[#allocation5 + $0x2c] sm:$0xf]
        %v321 = vld [vmem:[#allocation5 + $0x30] sm:$0xf]
        %v322 = vld [vmem:[#allocation5 + $0x34] sm:$0xf]
        %v323 = vld [vmem:[#allocation5 + $0x38] sm:$0xf]
        %v324 = vld [vmem:[#allocation5 + $0x3c] sm:$0xf]
        %v325 = vld [vmem:[%s2] sm:$0x1]
        %v327 = vlaneseq
        %v328 = vshrl.u32 %v327, 7
        %v329 = vsub.s32 0, %v328
        %v330 = vrot.slane %v325, %v329
        %v348 = vunpack.c.l.b16 %v309
        %v349 = vunpack.c.l.b16 %v310
        %v350 = vunpack.c.l.b16 %v311
        %v351 = vunpack.c.l.b16 %v312
        %v352 = vunpack.c.l.b16 %v313
        %v353 = vunpack.c.l.b16 %v314
        %v354 = vunpack.c.l.b16 %v315
        %v355 = vunpack.c.l.b16 %v316
        %v356 = vunpack.c.l.b16 %v317
        %v357 = vunpack.c.l.b16 %v318
        %v358 = vunpack.c.l.b16 %v319
        %v359 = vunpack.c.l.b16 %v320
        %v360 = vunpack.c.l.b16 %v321
        %v361 = vunpack.c.l.b16 %v322
        %v362 = vunpack.c.l.b16 %v323
        %v363 = vunpack.c.l.b16 %v324
        %v364 = vpack.c.b16 %v349, %v348
        %v365 = vpack.c.b16 %v351, %v350
        %v366 = vpack.c.b16 %v353, %v352
        %v367 = vpack.c.b16 %v355, %v354
        %v368 = vpack.c.b16 %v357, %v356
        %v369 = vpack.c.b16 %v359, %v358
        %v370 = vpack.c.b16 %v361, %v360
        %v371 = vpack.c.b16 %v363, %v362
        %380 = vmatprep.subr.bf16.mxu0 0
        %381 = vmatpush1.bf16.msra.mxu0 %v364
        %382 = vmatprep.subr.bf16.mxu0 0
        %383 = vmatpush1.bf16.msra.mxu0 %v365
        %384 = vmatprep.subr.bf16.mxu0 0
        %385 = vmatpush1.bf16.msra.mxu0 %v366
        %386 = vmatprep.subr.bf16.mxu0 0
        %387 = vmatpush1.bf16.msra.mxu0 %v367
        %388 = vmatprep.subr.bf16.mxu0 0
        %389 = vmatpush1.bf16.msra.mxu0 %v368
        %390 = vmatprep.subr.bf16.mxu0 0
        %391 = vmatpush1.bf16.msra.mxu0 %v369
        %392 = vmatprep.subr.bf16.mxu0 0
        %393 = vmatpush1.bf16.msra.mxu0 %v370
        %394 = vmatprep.subr.bf16.mxu0 0
        %395 = vmatpush1.bf16.msra.mxu0 %v371
        %396 = vmatprep.subr.bf16.mxu0 0
        %397 = vmatpush1.bf16.msra.mxu0 0
        %398 = vmatprep.subr.bf16.mxu0 0
        %399 = vmatpush1.bf16.msra.mxu0 0
        %400 = vmatprep.subr.bf16.mxu0 0
        %401 = vmatpush1.bf16.msra.mxu0 0
        %402 = vmatprep.subr.bf16.mxu0 0
        %403 = vmatpush1.bf16.msra.mxu0 0
        %404 = vmatprep.subr.bf16.mxu0 0
        %405 = vmatpush1.bf16.msra.mxu0 0
        %406 = vmatprep.subr.bf16.mxu0 0
        %407 = vmatpush1.bf16.msra.mxu0 0
        %408 = vmatprep.subr.bf16.mxu0 0
        %409 = vmatpush1.bf16.msra.mxu0 0
        %410 = vmatprep.subr.bf16.mxu0 0
        %411 = vmatpush1.bf16.msra.mxu0 0
        %412 = vmatprep.mubr.bf16.mxu0 0
        %413 = vmatmul.mubr.bf16.gmra.mrb[0].mxu0 %v293
        %v414 = vpop.f32.mrb[0].mxu0
        %v415 = vadd.f32 %v330, %v414
        %v416 = vpop.f32.mrb[0].mxu0
        %v417 = vpop.f32.mrb[0].mxu0
        %v418 = vadd.f32 %v330, %v417
        %v419 = vpop.f32.mrb[0].mxu0
        %420 = vmatprep.mubr.bf16.mxu0 0
        %421 = vmatmul.mubr.bf16.gmra.mrb[0].mxu0 %v294
        %v422 = vpop.f32.mrb[0].mxu0
        %v423 = vadd.f32 %v330, %v422
        %v424 = vpop.f32.mrb[0].mxu0
        %v425 = vpop.f32.mrb[0].mxu0
        %v426 = vadd.f32 %v330, %v425
        %v427 = vpop.f32.mrb[0].mxu0
        %428 = vmatprep.mubr.bf16.mxu0 0
        %429 = vmatmul.mubr.bf16.gmra.mrb[0].mxu0 %v295
        %v430 = vpop.f32.mrb[0].mxu0
        %v431 = vadd.f32 %v330, %v430
        %v432 = vpop.f32.mrb[0].mxu0
        %v433 = vpop.f32.mrb[0].mxu0
        %v434 = vadd.f32 %v330, %v433
        %v435 = vpop.f32.mrb[0].mxu0
        %436 = vmatprep.mubr.bf16.mxu0 0
        %437 = vmatmul.mubr.bf16.gmra.mrb[0].mxu0 %v296
        %v438 = vpop.f32.mrb[0].mxu0
        %v439 = vadd.f32 %v330, %v438
        %v440 = vpop.f32.mrb[0].mxu0
        %v441 = vpop.f32.mrb[0].mxu0
        %v442 = vadd.f32 %v330, %v441
        %v443 = vpop.f32.mrb[0].mxu0
        %444 = vmatprep.mubr.bf16.mxu0 0
        %445 = vmatmul.mubr.bf16.gmra.mrb[0].mxu0 %v297
        %v446 = vpop.f32.mrb[0].mxu0
        %v447 = vadd.f32 %v330, %v446
        %v448 = vpop.f32.mrb[0].mxu0
        %v449 = vpop.f32.mrb[0].mxu0
        %v450 = vadd.f32 %v330, %v449
        %v451 = vpop.f32.mrb[0].mxu0
        %452 = vmatprep.mubr.bf16.mxu0 0
        %453 = vmatmul.mubr.bf16.gmra.mrb[0].mxu0 %v298
        %v454 = vpop.f32.mrb[0].mxu0
        %v455 = vadd.f32 %v330, %v454
        %v456 = vpop.f32.mrb[0].mxu0
        %v457 = vpop.f32.mrb[0].mxu0
        %v458 = vadd.f32 %v330, %v457
        %v459 = vpop.f32.mrb[0].mxu0
        %460 = vmatprep.mubr.bf16.mxu0 0
        %461 = vmatmul.mubr.bf16.gmra.mrb[0].mxu0 %v299
        %v462 = vpop.f32.mrb[0].mxu0
        %v463 = vadd.f32 %v330, %v462
        %v464 = vpop.f32.mrb[0].mxu0
        %v465 = vpop.f32.mrb[0].mxu0
        %v466 = vadd.f32 %v330, %v465
        %v467 = vpop.f32.mrb[0].mxu0
        %468 = vmatprep.mubr.bf16.mxu0 0
        %469 = vmatmul.mubr.bf16.gmra.mrb[0].mxu0 %v300
        %v470 = vpop.f32.mrb[0].mxu0
        %v471 = vadd.f32 %v330, %v470
        %v472 = vpop.f32.mrb[0].mxu0
        %v473 = vpop.f32.mrb[0].mxu0
        %v474 = vadd.f32 %v330, %v473
        %v475 = vpop.f32.mrb[0].mxu0
        %476 = vmatprep.mubr.bf16.mxu0 0
        %477 = vmatmul.mubr.bf16.gmra.mrb[0].mxu0 %v301
        %v478 = vpop.f32.mrb[0].mxu0
        %v479 = vadd.f32 %v330, %v478
        %v480 = vpop.f32.mrb[0].mxu0
        %v481 = vpop.f32.mrb[0].mxu0
        %v482 = vadd.f32 %v330, %v481
        %v483 = vpop.f32.mrb[0].mxu0
        %484 = vmatprep.mubr.bf16.mxu0 0
        %485 = vmatmul.mubr.bf16.gmra.mrb[0].mxu0 %v302
        %v486 = vpop.f32.mrb[0].mxu0
        %v487 = vadd.f32 %v330, %v486
        %v488 = vpop.f32.mrb[0].mxu0
        %v489 = vpop.f32.mrb[0].mxu0
        %v490 = vadd.f32 %v330, %v489
        %v491 = vpop.f32.mrb[0].mxu0
        %492 = vmatprep.mubr.bf16.mxu0 0
        %493 = vmatmul.mubr.bf16.gmra.mrb[0].mxu0 %v303
        %v494 = vpop.f32.mrb[0].mxu0
        %v495 = vadd.f32 %v330, %v494
        %v496 = vpop.f32.mrb[0].mxu0
        %v497 = vpop.f32.mrb[0].mxu0
        %v498 = vadd.f32 %v330, %v497
        %v499 = vpop.f32.mrb[0].mxu0
        %500 = vmatprep.mubr.bf16.mxu0 0
        %501 = vmatmul.mubr.bf16.gmra.mrb[0].mxu0 %v304
        %v502 = vpop.f32.mrb[0].mxu0
        %v503 = vadd.f32 %v330, %v502
        %v504 = vpop.f32.mrb[0].mxu0
        %v505 = vpop.f32.mrb[0].mxu0
        %v506 = vadd.f32 %v330, %v505
        %v507 = vpop.f32.mrb[0].mxu0
        %508 = vmatprep.mubr.bf16.mxu0 0
        %509 = vmatmul.mubr.bf16.gmra.mrb[0].mxu0 %v305
        %v510 = vpop.f32.mrb[0].mxu0
        %v511 = vadd.f32 %v330, %v510
        %v512 = vpop.f32.mrb[0].mxu0
        %v513 = vpop.f32.mrb[0].mxu0
        %v514 = vadd.f32 %v330, %v513
        %v515 = vpop.f32.mrb[0].mxu0
        %516 = vmatprep.mubr.bf16.mxu0 0
        %517 = vmatmul.mubr.bf16.gmra.mrb[0].mxu0 %v306
        %v518 = vpop.f32.mrb[0].mxu0
        %v519 = vadd.f32 %v330, %v518
        %v520 = vpop.f32.mrb[0].mxu0
        %v521 = vpop.f32.mrb[0].mxu0
        %v522 = vadd.f32 %v330, %v521
        %v523 = vpop.f32.mrb[0].mxu0
        %524 = vmatprep.mubr.bf16.mxu0 0
        %525 = vmatmul.mubr.bf16.gmra.mrb[0].mxu0 %v307
        %v526 = vpop.f32.mrb[0].mxu0
        %v527 = vadd.f32 %v330, %v526
        %v528 = vpop.f32.mrb[0].mxu0
        %v529 = vpop.f32.mrb[0].mxu0
        %v530 = vadd.f32 %v330, %v529
        %v531 = vpop.f32.mrb[0].mxu0
        %532 = vmatprep.mubr.bf16.mxu0 0
        %533 = vmatmul.mubr.bf16.gmra.mrb[0].mxu0 %v308
        %v534 = vpop.f32.mrb[0].mxu0
        %v535 = vadd.f32 %v330, %v534
        %v536 = vpop.f32.mrb[0].mxu0
        %v537 = vpop.f32.mrb[0].mxu0
        %v538 = vadd.f32 %v330, %v537
        %v539 = vpop.f32.mrb[0].mxu0
        %540 = vdwg.mxu0
        %v541 = vmul.f32 %v415, 0.5
        %v542 = vmul.f32 %v418, 0.5
        %v543 = vmul.f32 %v423, 0.5
        %v544 = vmul.f32 %v426, 0.5
        %v545 = vmul.f32 %v431, 0.5
        %v546 = vmul.f32 %v434, 0.5
        %v547 = vmul.f32 %v439, 0.5
        %v548 = vmul.f32 %v442, 0.5
        %v549 = vmul.f32 %v447, 0.5
        %v550 = vmul.f32 %v450, 0.5
        %v551 = vmul.f32 %v455, 0.5
        %v552 = vmul.f32 %v458, 0.5
        %v553 = vmul.f32 %v463, 0.5
        %v554 = vmul.f32 %v466, 0.5
        %v555 = vmul.f32 %v471, 0.5
        %v556 = vmul.f32 %v474, 0.5
        %v557 = vmul.f32 %v479, 0.5
        %v558 = vmul.f32 %v482, 0.5
        %v559 = vmul.f32 %v487, 0.5
        %v560 = vmul.f32 %v490, 0.5
        %v561 = vmul.f32 %v495, 0.5
        %v562 = vmul.f32 %v498, 0.5
        %v563 = vmul.f32 %v503, 0.5
        %v564 = vmul.f32 %v506, 0.5
        %v565 = vmul.f32 %v511, 0.5
        %v566 = vmul.f32 %v514, 0.5
        %v567 = vmul.f32 %v519, 0.5
        %v568 = vmul.f32 %v522, 0.5
        %v569 = vmul.f32 %v527, 0.5
        %v570 = vmul.f32 %v530, 0.5
        %v571 = vmul.f32 %v535, 0.5
        %v572 = vmul.f32 %v538, 0.5
        %v573 = vmul.f32 %v415, 0.70710677
        %v574 = vmul.f32 %v418, 0.70710677
        %v575 = vmul.f32 %v423, 0.70710677
        %v576 = vmul.f32 %v426, 0.70710677
        %v577 = vmul.f32 %v431, 0.70710677
        %v578 = vmul.f32 %v434, 0.70710677
        %v579 = vmul.f32 %v439, 0.70710677
        %v580 = vmul.f32 %v442, 0.70710677
        %v581 = vmul.f32 %v447, 0.70710677
        %v582 = vmul.f32 %v450, 0.70710677
        %v583 = vmul.f32 %v455, 0.70710677
        %v584 = vmul.f32 %v458, 0.70710677
        %v585 = vmul.f32 %v463, 0.70710677
        %v586 = vmul.f32 %v466, 0.70710677
        %v587 = vmul.f32 %v471, 0.70710677
        %v588 = vmul.f32 %v474, 0.70710677
        %v589 = vmul.f32 %v479, 0.70710677
        %v590 = vmul.f32 %v482, 0.70710677
        %v591 = vmul.f32 %v487, 0.70710677
        %v592 = vmul.f32 %v490, 0.70710677
        %v593 = vmul.f32 %v495, 0.70710677
        %v594 = vmul.f32 %v498, 0.70710677
        %v595 = vmul.f32 %v503, 0.70710677
        %v596 = vmul.f32 %v506, 0.70710677
        %v597 = vmul.f32 %v511, 0.70710677
        %v598 = vmul.f32 %v514, 0.70710677
        %v599 = vmul.f32 %v519, 0.70710677
        %v600 = vmul.f32 %v522, 0.70710677
        %v601 = vmul.f32 %v527, 0.70710677
        %v602 = vmul.f32 %v530, 0.70710677
        %v603 = vmul.f32 %v535, 0.70710677
        %v604 = vmul.f32 %v538, 0.70710677
        %v605 = verf.f32.pop %v573
        %v606 = verf.f32.pop %v574
        %v607 = verf.f32.pop %v575
        %v608 = verf.f32.pop %v576
        %v609 = verf.f32.pop %v577
        %v610 = verf.f32.pop %v578
        %v611 = verf.f32.pop %v579
        %v612 = verf.f32.pop %v580
        %v613 = verf.f32.pop %v581
        %v614 = verf.f32.pop %v582
        %v615 = verf.f32.pop %v583
        %v616 = verf.f32.pop %v584
        %v617 = verf.f32.pop %v585
        %v618 = verf.f32.pop %v586
        %v619 = verf.f32.pop %v587
        %v620 = verf.f32.pop %v588
        %v621 = verf.f32.pop %v589
        %v622 = verf.f32.pop %v590
        %v623 = verf.f32.pop %v591
        %v624 = verf.f32.pop %v592
        %v625 = verf.f32.pop %v593
        %v626 = verf.f32.pop %v594
        %v627 = verf.f32.pop %v595
        %v628 = verf.f32.pop %v596
        %v629 = verf.f32.pop %v597
        %v630 = verf.f32.pop %v598
        %v631 = verf.f32.pop %v599
        %v632 = verf.f32.pop %v600
        %v633 = verf.f32.pop %v601
        %v634 = verf.f32.pop %v602
        %v635 = verf.f32.pop %v603
        %v636 = verf.f32.pop %v604
        %v637 = vadd.f32 %v605, 1.0
        %v638 = vadd.f32 %v606, 1.0
        %v639 = vadd.f32 %v607, 1.0
        %v640 = vadd.f32 %v608, 1.0
        %v641 = vadd.f32 %v609, 1.0
        %v642 = vadd.f32 %v610, 1.0
        %v643 = vadd.f32 %v611, 1.0
        %v644 = vadd.f32 %v612, 1.0
        %v645 = vadd.f32 %v613, 1.0
        %v646 = vadd.f32 %v614, 1.0
        %v647 = vadd.f32 %v615, 1.0
        %v648 = vadd.f32 %v616, 1.0
        %v649 = vadd.f32 %v617, 1.0
        %v650 = vadd.f32 %v618, 1.0
        %v651 = vadd.f32 %v619, 1.0
        %v652 = vadd.f32 %v620, 1.0
        %v653 = vadd.f32 %v621, 1.0
        %v654 = vadd.f32 %v622, 1.0
        %v655 = vadd.f32 %v623, 1.0
        %v656 = vadd.f32 %v624, 1.0
        %v657 = vadd.f32 %v625, 1.0
        %v658 = vadd.f32 %v626, 1.0
        %v659 = vadd.f32 %v627, 1.0
        %v660 = vadd.f32 %v628, 1.0
        %v661 = vadd.f32 %v629, 1.0
        %v662 = vadd.f32 %v630, 1.0
        %v663 = vadd.f32 %v631, 1.0
        %v664 = vadd.f32 %v632, 1.0
        %v665 = vadd.f32 %v633, 1.0
        %v666 = vadd.f32 %v634, 1.0
        %v667 = vadd.f32 %v635, 1.0
        %v668 = vadd.f32 %v636, 1.0
        %v669 = vmul.f32 %v541, %v637
        %v670 = vmul.f32 %v542, %v638
        %v671 = vmul.f32 %v543, %v639
        %v672 = vmul.f32 %v544, %v640
        %v673 = vmul.f32 %v545, %v641
        %v674 = vmul.f32 %v546, %v642
        %v675 = vmul.f32 %v547, %v643
        %v676 = vmul.f32 %v548, %v644
        %v677 = vmul.f32 %v549, %v645
        %v678 = vmul.f32 %v550, %v646
        %v679 = vmul.f32 %v551, %v647
        %v680 = vmul.f32 %v552, %v648
        %v681 = vmul.f32 %v553, %v649
        %v682 = vmul.f32 %v554, %v650
        %v683 = vmul.f32 %v555, %v651
        %v684 = vmul.f32 %v556, %v652
        %v685 = vmul.f32 %v557, %v653
        %v686 = vmul.f32 %v558, %v654
        %v687 = vmul.f32 %v559, %v655
        %v688 = vmul.f32 %v560, %v656
        %v689 = vmul.f32 %v561, %v657
        %v690 = vmul.f32 %v562, %v658
        %v691 = vmul.f32 %v563, %v659
        %v692 = vmul.f32 %v564, %v660
        %v693 = vmul.f32 %v565, %v661
        %v694 = vmul.f32 %v566, %v662
        %v695 = vmul.f32 %v567, %v663
        %v696 = vmul.f32 %v568, %v664
        %v697 = vmul.f32 %v569, %v665
        %v698 = vmul.f32 %v570, %v666
        %v699 = vmul.f32 %v571, %v667
        %v700 = vmul.f32 %v572, %v668
        %v701 = vld [vmem:[%s3] sm:$0x1]
        %v702 = vld [vmem:[%s4] sm:$0x1]
        %703 = vadd.xlane.f32.xlu0 %v669
        %v704 = vpop.xlane.xlu0 %703
        %705 = vadd.xlane.f32.xlu0 %v670
        %v706 = vpop.xlane.xlu0 %705
        %707 = vadd.xlane.f32.xlu0 %v671
        %v708 = vpop.xlane.xlu0 %707
        %709 = vadd.xlane.f32.xlu0 %v672
        %v710 = vpop.xlane.xlu0 %709
        %711 = vadd.xlane.f32.xlu0 %v673
        %v712 = vpop.xlane.xlu0 %711
        %713 = vadd.xlane.f32.xlu0 %v674
        %v714 = vpop.xlane.xlu0 %713
        %715 = vadd.xlane.f32.xlu0 %v675
        %v716 = vpop.xlane.xlu0 %715
        %717 = vadd.xlane.f32.xlu0 %v676
        %v718 = vpop.xlane.xlu0 %717
        %719 = vadd.xlane.f32.xlu0 %v677
        %v720 = vpop.xlane.xlu0 %719
        %721 = vadd.xlane.f32.xlu0 %v678
        %v722 = vpop.xlane.xlu0 %721
        %723 = vadd.xlane.f32.xlu0 %v679
        %v724 = vpop.xlane.xlu0 %723
        %725 = vadd.xlane.f32.xlu0 %v680
        %v726 = vpop.xlane.xlu0 %725
        %727 = vadd.xlane.f32.xlu0 %v681
        %v728 = vpop.xlane.xlu0 %727
        %729 = vadd.xlane.f32.xlu0 %v682
        %v730 = vpop.xlane.xlu0 %729
        %731 = vadd.xlane.f32.xlu0 %v683
        %v732 = vpop.xlane.xlu0 %731
        %733 = vadd.xlane.f32.xlu0 %v684
        %v734 = vpop.xlane.xlu0 %733
        %735 = vadd.xlane.f32.xlu0 %v685
        %v736 = vpop.xlane.xlu0 %735
        %737 = vadd.xlane.f32.xlu0 %v686
        %v738 = vpop.xlane.xlu0 %737
        %739 = vadd.xlane.f32.xlu0 %v687
        %v740 = vpop.xlane.xlu0 %739
        %741 = vadd.xlane.f32.xlu0 %v688
        %v742 = vpop.xlane.xlu0 %741
        %743 = vadd.xlane.f32.xlu0 %v689
        %v744 = vpop.xlane.xlu0 %743
        %745 = vadd.xlane.f32.xlu0 %v690
        %v746 = vpop.xlane.xlu0 %745
        %747 = vadd.xlane.f32.xlu0 %v691
        %v748 = vpop.xlane.xlu0 %747
        %749 = vadd.xlane.f32.xlu0 %v692
        %v750 = vpop.xlane.xlu0 %749
        %751 = vadd.xlane.f32.xlu0 %v693
        %v752 = vpop.xlane.xlu0 %751
        %753 = vadd.xlane.f32.xlu0 %v694
        %v754 = vpop.xlane.xlu0 %753
        %755 = vadd.xlane.f32.xlu0 %v695
        %v756 = vpop.xlane.xlu0 %755
        %757 = vadd.xlane.f32.xlu0 %v696
        %v758 = vpop.xlane.xlu0 %757
        %759 = vadd.xlane.f32.xlu0 %v697
        %v760 = vpop.xlane.xlu0 %759
        %761 = vadd.xlane.f32.xlu0 %v698
        %v762 = vpop.xlane.xlu0 %761
        %763 = vadd.xlane.f32.xlu0 %v699
        %v764 = vpop.xlane.xlu0 %763
        %765 = vadd.xlane.f32.xlu0 %v700
        %v766 = vpop.xlane.xlu0 %765
        %v767 = vmul.f32 %v704, 0.0078125
        %v768 = vmul.f32 %v706, 0.0078125
        %v769 = vmul.f32 %v708, 0.0078125
        %v770 = vmul.f32 %v710, 0.0078125
        %v771 = vmul.f32 %v712, 0.0078125
        %v772 = vmul.f32 %v714, 0.0078125
        %v773 = vmul.f32 %v716, 0.0078125
        %v774 = vmul.f32 %v718, 0.0078125
        %v775 = vmul.f32 %v720, 0.0078125
        %v776 = vmul.f32 %v722, 0.0078125
        %v777 = vmul.f32 %v724, 0.0078125
        %v778 = vmul.f32 %v726, 0.0078125
        %v779 = vmul.f32 %v728, 0.0078125
        %v780 = vmul.f32 %v730, 0.0078125
        %v781 = vmul.f32 %v732, 0.0078125
        %v782 = vmul.f32 %v734, 0.0078125
        %v783 = vmul.f32 %v736, 0.0078125
        %v784 = vmul.f32 %v738, 0.0078125
        %v785 = vmul.f32 %v740, 0.0078125
        %v786 = vmul.f32 %v742, 0.0078125
        %v787 = vmul.f32 %v744, 0.0078125
        %v788 = vmul.f32 %v746, 0.0078125
        %v789 = vmul.f32 %v748, 0.0078125
        %v790 = vmul.f32 %v750, 0.0078125
        %v791 = vmul.f32 %v752, 0.0078125
        %v792 = vmul.f32 %v754, 0.0078125
        %v793 = vmul.f32 %v756, 0.0078125
        %v794 = vmul.f32 %v758, 0.0078125
        %v795 = vmul.f32 %v760, 0.0078125
        %v796 = vmul.f32 %v762, 0.0078125
        %v797 = vmul.f32 %v764, 0.0078125
        %v798 = vmul.f32 %v766, 0.0078125
        %v799 = vsub.f32 %v669, %v767
        %v800 = vsub.f32 %v670, %v768
        %v801 = vsub.f32 %v671, %v769
        %v802 = vsub.f32 %v672, %v770
        %v803 = vsub.f32 %v673, %v771
        %v804 = vsub.f32 %v674, %v772
        %v805 = vsub.f32 %v675, %v773
        %v806 = vsub.f32 %v676, %v774
        %v807 = vsub.f32 %v677, %v775
        %v808 = vsub.f32 %v678, %v776
        %v809 = vsub.f32 %v679, %v777
        %v810 = vsub.f32 %v680, %v778
        %v811 = vsub.f32 %v681, %v779
        %v812 = vsub.f32 %v682, %v780
        %v813 = vsub.f32 %v683, %v781
        %v814 = vsub.f32 %v684, %v782
        %v815 = vsub.f32 %v685, %v783
        %v816 = vsub.f32 %v686, %v784
        %v817 = vsub.f32 %v687, %v785
        %v818 = vsub.f32 %v688, %v786
        %v819 = vsub.f32 %v689, %v787
        %v820 = vsub.f32 %v690, %v788
        %v821 = vsub.f32 %v691, %v789
        %v822 = vsub.f32 %v692, %v790
        %v823 = vsub.f32 %v693, %v791
        %v824 = vsub.f32 %v694, %v792
        %v825 = vsub.f32 %v695, %v793
        %v826 = vsub.f32 %v696, %v794
        %v827 = vsub.f32 %v697, %v795
        %v828 = vsub.f32 %v698, %v796
        %v829 = vsub.f32 %v699, %v797
        %v830 = vsub.f32 %v700, %v798
        %v831 = vmul.f32 %v799, %v799
        %v832 = vmul.f32 %v800, %v800
        %v833 = vmul.f32 %v801, %v801
        %v834 = vmul.f32 %v802, %v802
        %v835 = vmul.f32 %v803, %v803
        %v836 = vmul.f32 %v804, %v804
        %v837 = vmul.f32 %v805, %v805
        %v838 = vmul.f32 %v806, %v806
        %v839 = vmul.f32 %v807, %v807
        %v840 = vmul.f32 %v808, %v808
        %v841 = vmul.f32 %v809, %v809
        %v842 = vmul.f32 %v810, %v810
        %v843 = vmul.f32 %v811, %v811
        %v844 = vmul.f32 %v812, %v812
        %v845 = vmul.f32 %v813, %v813
        %v846 = vmul.f32 %v814, %v814
        %v847 = vmul.f32 %v815, %v815
        %v848 = vmul.f32 %v816, %v816
        %v849 = vmul.f32 %v817, %v817
        %v850 = vmul.f32 %v818, %v818
        %v851 = vmul.f32 %v819, %v819
        %v852 = vmul.f32 %v820, %v820
        %v853 = vmul.f32 %v821, %v821
        %v854 = vmul.f32 %v822, %v822
        %v855 = vmul.f32 %v823, %v823
        %v856 = vmul.f32 %v824, %v824
        %v857 = vmul.f32 %v825, %v825
        %v858 = vmul.f32 %v826, %v826
        %v859 = vmul.f32 %v827, %v827
        %v860 = vmul.f32 %v828, %v828
        %v861 = vmul.f32 %v829, %v829
        %v862 = vmul.f32 %v830, %v830
        %863 = vadd.xlane.f32.xlu0 %v831
        %v864 = vpop.xlane.xlu0 %863
        %865 = vadd.xlane.f32.xlu0 %v832
        %v866 = vpop.xlane.xlu0 %865
        %867 = vadd.xlane.f32.xlu0 %v833
        %v868 = vpop.xlane.xlu0 %867
        %869 = vadd.xlane.f32.xlu0 %v834
        %v870 = vpop.xlane.xlu0 %869
        %871 = vadd.xlane.f32.xlu0 %v835
        %v872 = vpop.xlane.xlu0 %871
        %873 = vadd.xlane.f32.xlu0 %v836
        %v874 = vpop.xlane.xlu0 %873
        %875 = vadd.xlane.f32.xlu0 %v837
        %v876 = vpop.xlane.xlu0 %875
        %877 = vadd.xlane.f32.xlu0 %v838
        %v878 = vpop.xlane.xlu0 %877
        %879 = vadd.xlane.f32.xlu0 %v839
        %v880 = vpop.xlane.xlu0 %879
        %881 = vadd.xlane.f32.xlu0 %v840
        %v882 = vpop.xlane.xlu0 %881
        %883 = vadd.xlane.f32.xlu0 %v841
        %v884 = vpop.xlane.xlu0 %883
        %885 = vadd.xlane.f32.xlu0 %v842
        %v886 = vpop.xlane.xlu0 %885
        %887 = vadd.xlane.f32.xlu0 %v843
        %v888 = vpop.xlane.xlu0 %887
        %889 = vadd.xlane.f32.xlu0 %v844
        %v890 = vpop.xlane.xlu0 %889
        %891 = vadd.xlane.f32.xlu0 %v845
        %v892 = vpop.xlane.xlu0 %891
        %893 = vadd.xlane.f32.xlu0 %v846
        %v894 = vpop.xlane.xlu0 %893
        %895 = vadd.xlane.f32.xlu0 %v847
        %v896 = vpop.xlane.xlu0 %895
        %897 = vadd.xlane.f32.xlu0 %v848
        %v898 = vpop.xlane.xlu0 %897
        %899 = vadd.xlane.f32.xlu0 %v849
        %v900 = vpop.xlane.xlu0 %899
        %901 = vadd.xlane.f32.xlu0 %v850
        %v902 = vpop.xlane.xlu0 %901
        %903 = vadd.xlane.f32.xlu0 %v851
        %v904 = vpop.xlane.xlu0 %903
        %905 = vadd.xlane.f32.xlu0 %v852
        %v906 = vpop.xlane.xlu0 %905
        %907 = vadd.xlane.f32.xlu0 %v853
        %v908 = vpop.xlane.xlu0 %907
        %909 = vadd.xlane.f32.xlu0 %v854
        %v910 = vpop.xlane.xlu0 %909
        %911 = vadd.xlane.f32.xlu0 %v855
        %v912 = vpop.xlane.xlu0 %911
        %913 = vadd.xlane.f32.xlu0 %v856
        %v914 = vpop.xlane.xlu0 %913
        %915 = vadd.xlane.f32.xlu0 %v857
        %v916 = vpop.xlane.xlu0 %915
        %917 = vadd.xlane.f32.xlu0 %v858
        %v918 = vpop.xlane.xlu0 %917
        %919 = vadd.xlane.f32.xlu0 %v859
        %v920 = vpop.xlane.xlu0 %919
        %921 = vadd.xlane.f32.xlu0 %v860
        %v922 = vpop.xlane.xlu0 %921
        %923 = vadd.xlane.f32.xlu0 %v861
        %v924 = vpop.xlane.xlu0 %923
        %925 = vadd.xlane.f32.xlu0 %v862
        %v926 = vpop.xlane.xlu0 %925
        %v927 = vmul.f32 %v864, 0.0078125
        %v928 = vmul.f32 %v866, 0.0078125
        %v929 = vmul.f32 %v868, 0.0078125
        %v930 = vmul.f32 %v870, 0.0078125
        %v931 = vmul.f32 %v872, 0.0078125
        %v932 = vmul.f32 %v874, 0.0078125
        %v933 = vmul.f32 %v876, 0.0078125
        %v934 = vmul.f32 %v878, 0.0078125
        %v935 = vmul.f32 %v880, 0.0078125
        %v936 = vmul.f32 %v882, 0.0078125
        %v937 = vmul.f32 %v884, 0.0078125
        %v938 = vmul.f32 %v886, 0.0078125
        %v939 = vmul.f32 %v888, 0.0078125
        %v940 = vmul.f32 %v890, 0.0078125
        %v941 = vmul.f32 %v892, 0.0078125
        %v942 = vmul.f32 %v894, 0.0078125
        %v943 = vmul.f32 %v896, 0.0078125
        %v944 = vmul.f32 %v898, 0.0078125
        %v945 = vmul.f32 %v900, 0.0078125
        %v946 = vmul.f32 %v902, 0.0078125
        %v947 = vmul.f32 %v904, 0.0078125
        %v948 = vmul.f32 %v906, 0.0078125
        %v949 = vmul.f32 %v908, 0.0078125
        %v950 = vmul.f32 %v910, 0.0078125
        %v951 = vmul.f32 %v912, 0.0078125
        %v952 = vmul.f32 %v914, 0.0078125
        %v953 = vmul.f32 %v916, 0.0078125
        %v954 = vmul.f32 %v918, 0.0078125
        %v955 = vmul.f32 %v920, 0.0078125
        %v956 = vmul.f32 %v922, 0.0078125
        %v957 = vmul.f32 %v924, 0.0078125
        %v958 = vmul.f32 %v926, 0.0078125
        %v959 = vadd.f32 %v927, 1e-05
        %v960 = vadd.f32 %v928, 1e-05
        %v961 = vadd.f32 %v929, 1e-05
        %v962 = vadd.f32 %v930, 1e-05
        %v963 = vadd.f32 %v931, 1e-05
        %v964 = vadd.f32 %v932, 1e-05
        %v965 = vadd.f32 %v933, 1e-05
        %v966 = vadd.f32 %v934, 1e-05
        %v967 = vadd.f32 %v935, 1e-05
        %v968 = vadd.f32 %v936, 1e-05
        %v969 = vadd.f32 %v937, 1e-05
        %v970 = vadd.f32 %v938, 1e-05
        %v971 = vadd.f32 %v939, 1e-05
        %v972 = vadd.f32 %v940, 1e-05
        %v973 = vadd.f32 %v941, 1e-05
        %v974 = vadd.f32 %v942, 1e-05
        %v975 = vadd.f32 %v943, 1e-05
        %v976 = vadd.f32 %v944, 1e-05
        %v977 = vadd.f32 %v945, 1e-05
        %v978 = vadd.f32 %v946, 1e-05
        %v979 = vadd.f32 %v947, 1e-05
        %v980 = vadd.f32 %v948, 1e-05
        %v981 = vadd.f32 %v949, 1e-05
        %v982 = vadd.f32 %v950, 1e-05
        %v983 = vadd.f32 %v951, 1e-05
        %v984 = vadd.f32 %v952, 1e-05
        %v985 = vadd.f32 %v953, 1e-05
        %v986 = vadd.f32 %v954, 1e-05
        %v987 = vadd.f32 %v955, 1e-05
        %v988 = vadd.f32 %v956, 1e-05
        %v989 = vadd.f32 %v957, 1e-05
        %v990 = vadd.f32 %v958, 1e-05
        %v991 = vrsqrt.pop %v959
        %v992 = vrsqrt.pop %v960
        %v993 = vrsqrt.pop %v961
        %v994 = vrsqrt.pop %v962
        %v995 = vrsqrt.pop %v963
        %v996 = vrsqrt.pop %v964
        %v997 = vrsqrt.pop %v965
        %v998 = vrsqrt.pop %v966
        %v999 = vrsqrt.pop %v967
        %v1000 = vrsqrt.pop %v968
        %v1001 = vrsqrt.pop %v969
        %v1002 = vrsqrt.pop %v970
        %v1003 = vrsqrt.pop %v971
        %v1004 = vrsqrt.pop %v972
        %v1005 = vrsqrt.pop %v973
        %v1006 = vrsqrt.pop %v974
        %v1007 = vrsqrt.pop %v975
        %v1008 = vrsqrt.pop %v976
        %v1009 = vrsqrt.pop %v977
        %v1010 = vrsqrt.pop %v978
        %v1011 = vrsqrt.pop %v979
        %v1012 = vrsqrt.pop %v980
        %v1013 = vrsqrt.pop %v981
        %v1014 = vrsqrt.pop %v982
        %v1015 = vrsqrt.pop %v983
        %v1016 = vrsqrt.pop %v984
        %v1017 = vrsqrt.pop %v985
        %v1018 = vrsqrt.pop %v986
        %v1019 = vrsqrt.pop %v987
        %v1020 = vrsqrt.pop %v988
        %v1021 = vrsqrt.pop %v989
        %v1022 = vrsqrt.pop %v990
        %v1023 = vmul.f32 %v799, %v991
        %v1024 = vmul.f32 %v800, %v992
        %v1025 = vmul.f32 %v801, %v993
        %v1026 = vmul.f32 %v802, %v994
        %v1027 = vmul.f32 %v803, %v995
        %v1028 = vmul.f32 %v804, %v996
        %v1029 = vmul.f32 %v805, %v997
        %v1030 = vmul.f32 %v806, %v998
        %v1031 = vmul.f32 %v807, %v999
        %v1032 = vmul.f32 %v808, %v1000
        %v1033 = vmul.f32 %v809, %v1001
        %v1034 = vmul.f32 %v810, %v1002
        %v1035 = vmul.f32 %v811, %v1003
        %v1036 = vmul.f32 %v812, %v1004
        %v1037 = vmul.f32 %v813, %v1005
        %v1038 = vmul.f32 %v814, %v1006
        %v1039 = vmul.f32 %v815, %v1007
        %v1040 = vmul.f32 %v816, %v1008
        %v1041 = vmul.f32 %v817, %v1009
        %v1042 = vmul.f32 %v818, %v1010
        %v1043 = vmul.f32 %v819, %v1011
        %v1044 = vmul.f32 %v820, %v1012
        %v1045 = vmul.f32 %v821, %v1013
        %v1046 = vmul.f32 %v822, %v1014
        %v1047 = vmul.f32 %v823, %v1015
        %v1048 = vmul.f32 %v824, %v1016
        %v1049 = vmul.f32 %v825, %v1017
        %v1050 = vmul.f32 %v826, %v1018
        %v1051 = vmul.f32 %v827, %v1019
        %v1052 = vmul.f32 %v828, %v1020
        %v1053 = vmul.f32 %v829, %v1021
        %v1054 = vmul.f32 %v830, %v1022
        %v1056 = vlaneseq
        %v1057 = vshrl.u32 %v1056, 7
        %v1058 = vsub.s32 0, %v1057
        %v1059 = vrot.slane %v701, %v1058
        %v1061 = vmul.f32 %v1023, %v1059
        %v1062 = vmul.f32 %v1024, %v1059
        %v1063 = vmul.f32 %v1025, %v1059
        %v1064 = vmul.f32 %v1026, %v1059
        %v1065 = vmul.f32 %v1027, %v1059
        %v1066 = vmul.f32 %v1028, %v1059
        %v1067 = vmul.f32 %v1029, %v1059
        %v1068 = vmul.f32 %v1030, %v1059
        %v1069 = vmul.f32 %v1031, %v1059
        %v1070 = vmul.f32 %v1032, %v1059
        %v1071 = vmul.f32 %v1033, %v1059
        %v1072 = vmul.f32 %v1034, %v1059
        %v1073 = vmul.f32 %v1035, %v1059
        %v1074 = vmul.f32 %v1036, %v1059
        %v1075 = vmul.f32 %v1037, %v1059
        %v1076 = vmul.f32 %v1038, %v1059
        %v1077 = vmul.f32 %v1039, %v1059
        %v1078 = vmul.f32 %v1040, %v1059
        %v1079 = vmul.f32 %v1041, %v1059
        %v1080 = vmul.f32 %v1042, %v1059
        %v1081 = vmul.f32 %v1043, %v1059
        %v1082 = vmul.f32 %v1044, %v1059
        %v1083 = vmul.f32 %v1045, %v1059
        %v1084 = vmul.f32 %v1046, %v1059
        %v1085 = vmul.f32 %v1047, %v1059
        %v1086 = vmul.f32 %v1048, %v1059
        %v1087 = vmul.f32 %v1049, %v1059
        %v1088 = vmul.f32 %v1050, %v1059
        %v1089 = vmul.f32 %v1051, %v1059
        %v1090 = vmul.f32 %v1052, %v1059
        %v1091 = vmul.f32 %v1053, %v1059
        %v1092 = vmul.f32 %v1054, %v1059
        %v1094 = vlaneseq
        %v1095 = vshrl.u32 %v1094, 7
        %v1096 = vsub.s32 0, %v1095
        %v1097 = vrot.slane %v702, %v1096
        %v1099 = vadd.f32 %v1061, %v1097
        %v1100 = vadd.f32 %v1062, %v1097
        %v1101 = vadd.f32 %v1063, %v1097
        %v1102 = vadd.f32 %v1064, %v1097
        %v1103 = vadd.f32 %v1065, %v1097
        %v1104 = vadd.f32 %v1066, %v1097
        %v1105 = vadd.f32 %v1067, %v1097
        %v1106 = vadd.f32 %v1068, %v1097
        %v1107 = vadd.f32 %v1069, %v1097
        %v1108 = vadd.f32 %v1070, %v1097
        %v1109 = vadd.f32 %v1071, %v1097
        %v1110 = vadd.f32 %v1072, %v1097
        %v1111 = vadd.f32 %v1073, %v1097
        %v1112 = vadd.f32 %v1074, %v1097
        %v1113 = vadd.f32 %v1075, %v1097
        %v1114 = vadd.f32 %v1076, %v1097
        %v1115 = vadd.f32 %v1077, %v1097
        %v1116 = vadd.f32 %v1078, %v1097
        %v1117 = vadd.f32 %v1079, %v1097
        %v1118 = vadd.f32 %v1080, %v1097
        %v1119 = vadd.f32 %v1081, %v1097
        %v1120 = vadd.f32 %v1082, %v1097
        %v1121 = vadd.f32 %v1083, %v1097
        %v1122 = vadd.f32 %v1084, %v1097
        %v1123 = vadd.f32 %v1085, %v1097
        %v1124 = vadd.f32 %v1086, %v1097
        %v1125 = vadd.f32 %v1087, %v1097
        %v1126 = vadd.f32 %v1088, %v1097
        %v1127 = vadd.f32 %v1089, %v1097
        %v1128 = vadd.f32 %v1090, %v1097
        %v1129 = vadd.f32 %v1091, %v1097
        %v1130 = vadd.f32 %v1092, %v1097
        %v1131 = vadd.f32 %v261, %v1099
        %v1132 = vadd.f32 %v262, %v1100
        %v1133 = vadd.f32 %v263, %v1101
        %v1134 = vadd.f32 %v264, %v1102
        %v1135 = vadd.f32 %v265, %v1103
        %v1136 = vadd.f32 %v266, %v1104
        %v1137 = vadd.f32 %v267, %v1105
        %v1138 = vadd.f32 %v268, %v1106
        %v1139 = vadd.f32 %v269, %v1107
        %v1140 = vadd.f32 %v270, %v1108
        %v1141 = vadd.f32 %v271, %v1109
        %v1142 = vadd.f32 %v272, %v1110
        %v1143 = vadd.f32 %v273, %v1111
        %v1144 = vadd.f32 %v274, %v1112
        %v1145 = vadd.f32 %v275, %v1113
        %v1146 = vadd.f32 %v276, %v1114
        %v1147 = vadd.f32 %v277, %v1115
        %v1148 = vadd.f32 %v278, %v1116
        %v1149 = vadd.f32 %v279, %v1117
        %v1150 = vadd.f32 %v280, %v1118
        %v1151 = vadd.f32 %v281, %v1119
        %v1152 = vadd.f32 %v282, %v1120
        %v1153 = vadd.f32 %v283, %v1121
        %v1154 = vadd.f32 %v284, %v1122
        %v1155 = vadd.f32 %v285, %v1123
        %v1156 = vadd.f32 %v286, %v1124
        %v1157 = vadd.f32 %v287, %v1125
        %v1158 = vadd.f32 %v288, %v1126
        %v1159 = vadd.f32 %v289, %v1127
        %v1160 = vadd.f32 %v290, %v1128
        %v1161 = vadd.f32 %v291, %v1129
        %v1162 = vadd.f32 %v292, %v1130
        %1163 = vst [vmem:[%s257] sm:$0xff] %v1131
        %1164 = vst [vmem:[%s257 + $0x8] sm:$0xff] %v1132
        %1165 = vst [vmem:[%s257 + $0x10] sm:$0xff] %v1133
        %1166 = vst [vmem:[%s257 + $0x18] sm:$0xff] %v1134
        %1167 = vst [vmem:[%s257 + $0x20] sm:$0xff] %v1135
        %1168 = vst [vmem:[%s257 + $0x28] sm:$0xff] %v1136
        %1169 = vst [vmem:[%s257 + $0x30] sm:$0xff] %v1137
        %1170 = vst [vmem:[%s257 + $0x38] sm:$0xff] %v1138
        %1171 = vst [vmem:[%s257 + $0x40] sm:$0xff] %v1139
        %1172 = vst [vmem:[%s257 + $0x48] sm:$0xff] %v1140
        %1173 = vst [vmem:[%s257 + $0x50] sm:$0xff] %v1141
        %1174 = vst [vmem:[%s257 + $0x58] sm:$0xff] %v1142
        %1175 = vst [vmem:[%s257 + $0x60] sm:$0xff] %v1143
        %1176 = vst [vmem:[%s257 + $0x68] sm:$0xff] %v1144
        %1177 = vst [vmem:[%s257 + $0x70] sm:$0xff] %v1145
        %1178 = vst [vmem:[%s257 + $0x78] sm:$0xff] %v1146
        %1179 = vst [vmem:[%s257 + $0x80] sm:$0xff] %v1147
        %1180 = vst [vmem:[%s257 + $0x88] sm:$0xff] %v1148
        %1181 = vst [vmem:[%s257 + $0x90] sm:$0xff] %v1149
        %1182 = vst [vmem:[%s257 + $0x98] sm:$0xff] %v1150
        %1183 = vst [vmem:[%s257 + $0xa0] sm:$0xff] %v1151
        %1184 = vst [vmem:[%s257 + $0xa8] sm:$0xff] %v1152
        %1185 = vst [vmem:[%s257 + $0xb0] sm:$0xff] %v1153
        %1186 = vst [vmem:[%s257 + $0xb8] sm:$0xff] %v1154
        %1187 = vst [vmem:[%s257 + $0xc0] sm:$0xff] %v1155
        %1188 = vst [vmem:[%s257 + $0xc8] sm:$0xff] %v1156
        %1189 = vst [vmem:[%s257 + $0xd0] sm:$0xff] %v1157
        %1190 = vst [vmem:[%s257 + $0xd8] sm:$0xff] %v1158
        %1191 = vst [vmem:[%s257 + $0xe0] sm:$0xff] %v1159
        %1192 = vst [vmem:[%s257 + $0xe8] sm:$0xff] %v1160
        %1193 = vst [vmem:[%s257 + $0xf0] sm:$0xff] %v1161
        %1194 = vst [vmem:[%s257 + $0xf8] sm:$0xff] %v1162
        %s1195 = sand.u32 %s141, 1
        %s1196 = scalar_lea.sflag [#allocation4], %s1195
        %s1197 = sand.u32 %s141, 1
        %s1198 = smul.addr %s1197, 256
        %s1199 = scalar_lea.vmem [#allocation7], %s1198
        // Predicated region
        $region49: #{tpu_custom_call.1} parent=39 // pred_check
          %p1200 = pneg %p151
        $region50: #{tpu_custom_call.1} parent=39 // pred_check_branch
          %1202 = sbr.rel (%p1200) target = $region52
        $region51: #{tpu_custom_call.1} parent=39 // pred_region
          %s1203 = smul.u32 32, %s23
          %s1205 = ssub.s32 4096, 4096
          %1206 = vsyncadd %s1196, %s1205
          %s1207 = smul.addr %s1203, 128
          %s1208 = scalar_lea.hbm %s5, %s1207
          %s1209 = sshll.u32 %s1199, 4
          %s1210 = int_to_ptr.vmem [resolvable:$true] %s1209
          %1215 = dma.vmem_to_hbm [thread:$0]  %s1210, 4096, %s1208, %s1196, 128, 128, 8
        $region52: #{tpu_custom_call.1} parent=39 // pred_fallthru
          _
      $region40: #{tpu_custom_call.1} parent=5 // pred_fallthru
        _
      %p1216 = scmp.le.s32.totalorder 2, %s18
      // Predicated region
      $region53: #{tpu_custom_call.1} parent=5 // pred_check
        %p1217 = pneg %p1216
      $region54: #{tpu_custom_call.1} parent=5 // pred_check_branch
        %1219 = sbr.rel (%p1217) target = $region56
      $region55: #{tpu_custom_call.1} parent=5 // pred_region
        %s1220 = ssub.s32 %s18, 2
        // Predicated region
        $region57: #{tpu_custom_call.1} parent=55 // pred_check
          %p1221 = pneg %p157
        $region58: #{tpu_custom_call.1} parent=55 // pred_check_branch
          %1223 = sbr.rel (%p1221) target = $region60
        $region59: #{tpu_custom_call.1} parent=55 // pred_region
          %s1224 = sand.u32 %s142, 1
          %s1225 = scalar_lea.sflag [#allocation4], %s1224
          %s1226 = sand.u32 %s142, 1
          %s1227 = smul.addr %s1226, 256
          %s1228 = scalar_lea.vmem [#allocation7], %s1227
          %1229 = dma.done %s1225, 4096
        $region60: #{tpu_custom_call.1} parent=55 // pred_fallthru
          _
      $region56: #{tpu_custom_call.1} parent=5 // pred_fallthru
        _
    $region6: #{tpu_custom_call.1} parent=1 // loop_footer
      %s22 = sadd.s32 1, %s18
    $region7: #{tpu_custom_call.1} parent=1 // loop_footer_branch
      %17 = sbr.rel target = $region3
    $region8: #{tpu_custom_call.1} parent=1 // loop_exit
      _
    %1230 = vsyncpa [#allocation3], 1
    %s1231 = scalar_lea.sflag [#allocation3], 1
    %1232 = vsyncpa %s1231, 1
    %1233 = vsyncpa [#allocation6], 1
    %1234 = vsyncpa [#allocation4], 1
    %s1235 = scalar_lea.sflag [#allocation4], 1
    %1236 = vsyncpa %s1235, 1

</llo_original>
